<compile_context>
chip_gen: v5e
topology: v5e:2x2
jax: 0.10.0
libtpu: 0.0.40
codegen_flags: <defaults>
</compile_context>

<pallas_src>
import functools

import jax
import jax.numpy as jnp
from jax import lax
from jax.experimental import pallas as pl
from jax.experimental.pallas import tpu as pltpu


def _round_up(x, m):
    return ((x + m - 1) // m) * m


def _knn_values_kernel(x_ref, kmat_ref, values_ref, out_ref, *, k):
    # x_ref:      (TM, P_pad)    unfolded patch rows (bias-folding ones column included)
    # kmat_ref:   (P_pad, N_pad) [-patches_flat.T ; bias row ; zero rows]
    # values_ref: (N_pad, V_pad) dictionary values (zero padded)
    # out_ref:    (TM, V_pad)    mean of values of the k nearest dictionary patches
    d = jnp.dot(x_ref[...], kmat_ref[...],
                preferred_element_type=jnp.float32)            # (TM, N_pad) distances
    n_pad = d.shape[1]
    iota = lax.broadcasted_iota(jnp.int32, d.shape, 1)

    def body(_, carry):
        d, w = carry
        # k-smallest extraction with first-index tie-break (matches
        # torch.topk(largest=False) / stable argsort semantics).
        m = jnp.min(d, axis=1, keepdims=True)
        first_idx = jnp.min(jnp.where(d == m, iota, n_pad), axis=1, keepdims=True)
        sel = iota == first_idx
        w = w + sel.astype(jnp.float32)                        # accumulate 0/1 weights
        d = jnp.where(sel, jnp.float32(jnp.inf), d)            # mask the selected column
        return d, w

    w0 = jnp.zeros(d.shape, jnp.float32)
    _, w = lax.fori_loop(0, k, body, (d, w0), unroll=True)
    # Single fused gather+mean matmul: W (0/1, exact) @ values.
    acc = jnp.dot(w, values_ref[...], preferred_element_type=jnp.float32)
    out_ref[...] = (acc * (1.0 / k)).astype(out_ref.dtype)


def neighbors_values_assigner(x, patches, values, *, stride, padding, k,
                              tile_m=256, mxu_dtype=jnp.float32):
    """Pallas implementation of NeighborsValuesAssigner.forward (default path)."""
    B, C, H, W = x.shape
    N, Cp, KH, KW = patches.shape
    assert Cp == C
    assert 1 <= k <= N, f"need 1 <= k <= N, got k={k}, N={N}"
    V = values.shape[1]
    P = C * KH * KW
    H_out = (H + 2 * padding - KH) // stride + 1
    W_out = (W + 2 * padding - KW) // stride + 1

    # --- glue: im2col / F.unfold equivalent (ordering = (C, kh, kw) row-major) ---
    # TODO(synk): fuse the unfold into the kernel (spatial-tile grid with KH*KW
    # shifted matmuls accumulating into the same distance tile) to avoid the
    # KH*KW x HBM blowup of x_unf on large images.
    x_pad = jnp.pad(x, ((0, 0), (0, 0), (padding, padding), (padding, padding)))
    cols = []
    for i in range(KH):
        for j in range(KW):
            cols.append(x_pad[:, :,
                              i:(H_out - 1) * stride + i + 1:stride,
                              j:(W_out - 1) * stride + j + 1:stride])
    x_unf = jnp.stack(cols, axis=2).reshape(B, P, H_out, W_out)          # (B,P,H',W')
    x_rows = jnp.transpose(x_unf, (0, 2, 3, 1)).reshape(B * H_out * W_out, P)
    x_rows = x_rows.astype(jnp.float32)

    M = B * H_out * W_out
    M_pad = _round_up(M, tile_m)
    P_pad = _round_up(P + 1, 128)        # +1 = ones column that folds the bias in
    N_pad = _round_up(N, 128)            # full MXU output width / selection lanes
    V_pad = _round_up(V, 128)            # lane-dense output stores

    # Unfolded rows with the bias-folding ones column, zero padded to (M_pad, P_pad).
    x_big = jnp.zeros((M_pad, P_pad), jnp.float32)
    x_big = x_big.at[:M, :P].set(x_rows)
    x_big = x_big.at[:, P].set(1.0)

    # Kernel matrix so that  distances = x_big @ kmat = x @ (-patches^T) + 0.5*||p||^2.
    patches_flat = patches.reshape(N, P).astype(jnp.float32)
    bias = 0.5 * jnp.sum(patches_flat ** 2, axis=1)                      # (N,)
    BIG = jnp.float32(1e30)              # padded dictionary slots can never win argmin
    kmat = jnp.zeros((P_pad, N_pad), jnp.float32)
    kmat = kmat.at[:P, :N].set(-patches_flat.T)
    kmat = kmat.at[P, :N].set(bias)
    kmat = kmat.at[P, N:].set(BIG)

    values_big = jnp.zeros((N_pad, V_pad), jnp.float32)
    values_big = values_big.at[:N, :V].set(values.astype(jnp.float32))

    # Optional bf16 MXU operands (the 0/1 gather matmul stays exact; distance
    # ordering may differ from an f32 reference on near-ties).
    x_big = x_big.astype(mxu_dtype)
    kmat = kmat.astype(mxu_dtype)

    # TODO(synk): for very large N on v7x (64 MiB VMEM), single-buffer the
    # resident dictionary operands (pipeline_mode=pl.Buffered(1)) and/or tile N
    # with a running k-smallest merge instead of loading the full dictionary.
    out_flat = pl.pallas_call(
        functools.partial(_knn_values_kernel, k=k),
        out_shape=jax.ShapeDtypeStruct((M_pad, V_pad), jnp.float32),
        grid=(M_pad // tile_m,),
        in_specs=[
            pl.BlockSpec((tile_m, P_pad), lambda i: (i, 0)),
            pl.BlockSpec((P_pad, N_pad), lambda i: (0, 0)),
            pl.BlockSpec((N_pad, V_pad), lambda i: (0, 0)),
        ],
        out_specs=pl.BlockSpec((tile_m, V_pad), lambda i: (i, 0)),
        compiler_params=pltpu.CompilerParams(
            dimension_semantics=("parallel",)),
    )(x_big, kmat, values_big)

    out = out_flat[:M, :V].reshape(B, H_out, W_out, V)
    # TODO(synk): use_linear_function ('full'/'partial'), values.ndim==3
    # (per-neighbor linear functions), use_angles, whitening and the faiss
    # branch are not implemented; only the default values-assigner path is.
    return jnp.transpose(out, (0, 3, 1, 2))                              # NCHW


def reference_forward(x, patches, values, *, stride, padding, k):
    """Pure-JAX reference reproducing the PyTorch module's default forward."""
    N = patches.shape[0]
    patches_flat = patches.reshape(N, -1)
    bias = 0.5 * jnp.sum(patches_flat ** 2, axis=1)
    dist = lax.conv_general_dilated(
        x, -patches, (stride, stride),
        [(padding, padding), (padding, padding)],
        dimension_numbers=("NCHW", "OIHW", "NCHW"),
    ) + bias[None, :, None, None]                                        # (B,N,H',W')
    idx = jnp.argsort(dist, axis=1)[:, :k]                               # (B,k,H',W')
    vals = values[idx]                                                   # (B,k,H',W',V)
    out = jnp.mean(vals, axis=1)                                         # (B,H',W',V)
    return jnp.transpose(out, (0, 3, 1, 2))                              # (B,V,H',W')


if __name__ == "__main__":
    key = jax.random.PRNGKey(0)
    k_x, k_p, k_v = jax.random.split(key, 3)

    B, C, H, W = 2, 4, 16, 16
    N_dict, KH, K_NN, V_DIM = 64, 3, 3, 8
    STRIDE, PADDING = 1, 1

    x = jax.random.normal(k_x, (B, C, H, W), jnp.float32)
    patches = jax.random.normal(k_p, (N_dict, C, KH, KH), jnp.float32)
    values = jax.random.normal(k_v, (N_dict, V_DIM), jnp.float32)

    out = neighbors_values_assigner(x, patches, values,
                                    stride=STRIDE, padding=PADDING, k=K_NN)
    out = jax.block_until_ready(out)

    ref = reference_forward(x, patches, values,
                            stride=STRIDE, padding=PADDING, k=K_NN)
    ref = jax.block_until_ready(ref)

    assert out.shape == (B, V_DIM, H, W), out.shape
    assert jnp.allclose(out, ref, rtol=1e-4, atol=1e-4), (
        float(jnp.max(jnp.abs(out - ref))))
    print("KERNEL_OK")
</pallas_src>

<mosaic_0001>
module attributes {stable_mosaic.version = 11 : i64} {
  func.func @_knn_values_kernel(%arg0: i32, %arg1: memref<256x128xf32, #tpu.memory_space<vmem>>, %arg2: memref<128x128xf32, #tpu.memory_space<vmem>>, %arg3: memref<128x128xf32, #tpu.memory_space<vmem>>, %arg4: memref<256x128xf32, #tpu.memory_space<vmem>>) attributes {dimension_semantics = [#tpu.dimension_semantics<parallel>], iteration_bounds = array<i64: 2>, scalar_prefetch = 0 : i64, scratch_operands = 0 : i64, tpu.core_type = #tpu.core_type<tc>, window_params = [{transform_indices = @transform_0, window_bounds = array<i64: 256, 128>}, {pipeline_mode = #tpu.pipeline_mode<synchronous>, transform_indices = @transform_1, window_bounds = array<i64: 128, 128>}, {pipeline_mode = #tpu.pipeline_mode<synchronous>, transform_indices = @transform_2, window_bounds = array<i64: 128, 128>}, {transform_indices = @transform_3, window_bounds = array<i64: 256, 128>}]} {
    %c0 = arith.constant 0 : index
    %c0_0 = arith.constant 0 : index
    %0 = vector.load %arg1[%c0, %c0_0] : memref<256x128xf32, #tpu.memory_space<vmem>>, vector<256x128xf32>
    %c0_1 = arith.constant 0 : index
    %c0_2 = arith.constant 0 : index
    %1 = vector.load %arg2[%c0_1, %c0_2] : memref<128x128xf32, #tpu.memory_space<vmem>>, vector<128x128xf32>
    %cst = arith.constant dense<0.000000e+00> : vector<256x128xf32>
    %2 = tpu.matmul %0, %1, %cst {dimension_numbers = #tpu.dot_dimension_numbers<[1], [0], [0], [1], [0, 0, 1, 1], [], []>} : vector<256x128xf32>, vector<128x128xf32>, vector<256x128xf32> -> vector<256x128xf32>
    %3 = tpu.iota {dimensions = array<i32: 1>} : vector<256x128xi32>
    %cst_3 = arith.constant 0.000000e+00 : f32
    %4 = vector.broadcast %cst_3 : f32 to vector<256x128xf32>
    %c0_i32 = arith.constant 0 : i32
    %cst_4 = arith.constant dense<0x7F800000> : vector<256xf32>
    %5 = vector.multi_reduction <minimumf>, %2, %cst_4 [1] : vector<256x128xf32> to vector<256xf32>
    %6 = vector.shape_cast %5 : vector<256xf32> to vector<256x1xf32>
    %7 = vector.broadcast %6 : vector<256x1xf32> to vector<256x128xf32>
    %8 = arith.cmpf oeq, %2, %7 : vector<256x128xf32>
    %c128_i32 = arith.constant 128 : i32
    %9 = vector.broadcast %c128_i32 : i32 to vector<256x128xi32>
    %10 = arith.select %8, %3, %9 : vector<256x128xi1>, vector<256x128xi32>
    %cst_5 = arith.constant dense<2147483647> : vector<256xi32>
    %11 = vector.multi_reduction <minsi>, %10, %cst_5 [1] : vector<256x128xi32> to vector<256xi32>
    %12 = vector.shape_cast %11 : vector<256xi32> to vector<256x1xi32>
    %13 = vector.broadcast %12 : vector<256x1xi32> to vector<256x128xi32>
    %14 = arith.cmpi eq, %3, %13 : vector<256x128xi32>
    %15 = arith.extui %14 : vector<256x128xi1> to vector<256x128xi32>
    %16 = arith.sitofp %15 : vector<256x128xi32> to vector<256x128xf32>
    %17 = arith.addf %4, %16 : vector<256x128xf32>
    %cst_6 = arith.constant 0x7F800000 : f32
    %18 = vector.broadcast %cst_6 : f32 to vector<256x128xf32>
    %19 = arith.select %14, %18, %2 : vector<256x128xi1>, vector<256x128xf32>
    %c1_i32 = arith.constant 1 : i32
    %cst_7 = arith.constant dense<0x7F800000> : vector<256xf32>
    %20 = vector.multi_reduction <minimumf>, %19, %cst_7 [1] : vector<256x128xf32> to vector<256xf32>
    %21 = vector.shape_cast %20 : vector<256xf32> to vector<256x1xf32>
    %22 = vector.broadcast %21 : vector<256x1xf32> to vector<256x128xf32>
    %23 = arith.cmpf oeq, %19, %22 : vector<256x128xf32>
    %c128_i32_8 = arith.constant 128 : i32
    %24 = vector.broadcast %c128_i32_8 : i32 to vector<256x128xi32>
    %25 = arith.select %23, %3, %24 : vector<256x128xi1>, vector<256x128xi32>
    %cst_9 = arith.constant dense<2147483647> : vector<256xi32>
    %26 = vector.multi_reduction <minsi>, %25, %cst_9 [1] : vector<256x128xi32> to vector<256xi32>
    %27 = vector.shape_cast %26 : vector<256xi32> to vector<256x1xi32>
    %28 = vector.broadcast %27 : vector<256x1xi32> to vector<256x128xi32>
    %29 = arith.cmpi eq, %3, %28 : vector<256x128xi32>
    %30 = arith.extui %29 : vector<256x128xi1> to vector<256x128xi32>
    %31 = arith.sitofp %30 : vector<256x128xi32> to vector<256x128xf32>
    %32 = arith.addf %17, %31 : vector<256x128xf32>
    %cst_10 = arith.constant 0x7F800000 : f32
    %33 = vector.broadcast %cst_10 : f32 to vector<256x128xf32>
    %34 = arith.select %29, %33, %19 : vector<256x128xi1>, vector<256x128xf32>
    %c2_i32 = arith.constant 2 : i32
    %cst_11 = arith.constant dense<0x7F800000> : vector<256xf32>
    %35 = vector.multi_reduction <minimumf>, %34, %cst_11 [1] : vector<256x128xf32> to vector<256xf32>
    %36 = vector.shape_cast %35 : vector<256xf32> to vector<256x1xf32>
    %37 = vector.broadcast %36 : vector<256x1xf32> to vector<256x128xf32>
    %38 = arith.cmpf oeq, %34, %37 : vector<256x128xf32>
    %c128_i32_12 = arith.constant 128 : i32
    %39 = vector.broadcast %c128_i32_12 : i32 to vector<256x128xi32>
    %40 = arith.select %38, %3, %39 : vector<256x128xi1>, vector<256x128xi32>
    %cst_13 = arith.constant dense<2147483647> : vector<256xi32>
    %41 = vector.multi_reduction <minsi>, %40, %cst_13 [1] : vector<256x128xi32> to vector<256xi32>
    %42 = vector.shape_cast %41 : vector<256xi32> to vector<256x1xi32>
    %43 = vector.broadcast %42 : vector<256x1xi32> to vector<256x128xi32>
    %44 = arith.cmpi eq, %3, %43 : vector<256x128xi32>
    %45 = arith.extui %44 : vector<256x128xi1> to vector<256x128xi32>
    %46 = arith.sitofp %45 : vector<256x128xi32> to vector<256x128xf32>
    %47 = arith.addf %32, %46 : vector<256x128xf32>
    %cst_14 = arith.constant 0x7F800000 : f32
    %48 = vector.broadcast %cst_14 : f32 to vector<256x128xf32>
    %49 = arith.select %44, %48, %34 : vector<256x128xi1>, vector<256x128xf32>
    %c0_15 = arith.constant 0 : index
    %c0_16 = arith.constant 0 : index
    %50 = vector.load %arg3[%c0_15, %c0_16] : memref<128x128xf32, #tpu.memory_space<vmem>>, vector<128x128xf32>
    %cst_17 = arith.constant dense<0.000000e+00> : vector<256x128xf32>
    %51 = tpu.matmul %47, %50, %cst_17 {dimension_numbers = #tpu.dot_dimension_numbers<[1], [0], [0], [1], [0, 0, 1, 1], [], []>} : vector<256x128xf32>, vector<128x128xf32>, vector<256x128xf32> -> vector<256x128xf32>
    %cst_18 = arith.constant 0.333333343 : f32
    %52 = vector.broadcast %cst_18 : f32 to vector<256x128xf32>
    %53 = arith.mulf %51, %52 : vector<256x128xf32>
    %c0_19 = arith.constant 0 : index
    %c0_20 = arith.constant 0 : index
    %54 = vector.load %arg4[%c0_19, %c0_20] : memref<256x128xf32, #tpu.memory_space<vmem>>, vector<256x128xf32>
    tpu.vector_store %arg4[%c0_19, %c0_20], %53 {strides = array<i32>} : memref<256x128xf32, #tpu.memory_space<vmem>>, vector<256x128xf32>,
    return
  }
  func.func @transform_0(%arg0: i32) -> (i32, i32) {
    %c0_i32 = arith.constant 0 : i32
    %c0_i32_0 = arith.constant 0 : i32
    return %arg0, %c0_i32 : i32, i32
  }
  func.func @transform_1(%arg0: i32) -> (i32, i32) {
    %c0_i32 = arith.constant 0 : i32
    %c0_i32_0 = arith.constant 0 : i32
    %c0_i32_1 = arith.constant 0 : i32
    return %c0_i32, %c0_i32_0 : i32, i32
  }
  func.func @transform_2(%arg0: i32) -> (i32, i32) {
    %c0_i32 = arith.constant 0 : i32
    %c0_i32_0 = arith.constant 0 : i32
    %c0_i32_1 = arith.constant 0 : i32
    return %c0_i32, %c0_i32_0 : i32, i32
  }
  func.func @transform_3(%arg0: i32) -> (i32, i32) {
    %c0_i32 = arith.constant 0 : i32
    %c0_i32_0 = arith.constant 0 : i32
    return %arg0, %c0_i32 : i32, i32
  }
}

</mosaic_0001>

<llo_original>
// kernel: tpu_custom_call.1
$region0: #{tpu_custom_call.1}
  #allocation0 [shape = 'u32[]', space=smem, size = 0x4, offset = 0x4, fixed_abs, tag = 'smem constant byte address 0x4 - core index']
  #allocation1 [shape = 'u32[72,128]{1,0:T(1,128)}', space=vmem, size = 0x9000, scoped, tag = 'internal scratch']
  %s0 = inlined_call_operand.hbm [shape: f32[512,128], index: 0, kind: input, shape index: {}]
  %s1 = inlined_call_operand.hbm [shape: f32[128,128], index: 1, kind: input, shape index: {}]
  %s2 = inlined_call_operand.hbm [shape: f32[128,128], index: 2, kind: input, shape index: {}]
  %s3 = inlined_call_operand.hbm [shape: f32[512,128], index: 3, kind: output, shape index: {}]
  %s4 = sld [smem:[#allocation0]]
  $region57: #{tpu_custom_call.1} parent=0
    _
  %s6 = ssub.s32 1, %s4
  %s7 = scalar_select 0, %s6, %s4
  $region1: #{tpu_custom_call.1} parent=0
    #allocation2 [shape = 'u8[262144]{0}', space=vmem, size = 0x40000, scoped, tag = 'input window, operand 0']
    #allocation3 [shape = 's32[2]{0}', space=sflag, size = 0x8, scoped, tag = 'scoped memory for tpu_custom_call.1']
    #allocation4 [shape = 's32[2]{0}', space=sflag, size = 0x8, scoped, tag = 'scoped memory for tpu_custom_call.1']
    #allocation5 [shape = 'u8[65536]{0}', space=vmem, size = 0x10000, scoped, tag = 'input window, operand 1, single buffered']
    #allocation6 [shape = 's32[1]{0}', space=sflag, size = 0x4, scoped, tag = 'scoped memory for tpu_custom_call.1']
    #allocation7 [shape = 'u8[65536]{0}', space=vmem, size = 0x10000, scoped, tag = 'input window, operand 2, single buffered']
    #allocation8 [shape = 'u8[262144]{0}', space=vmem, size = 0x40000, scoped, tag = 'output window, operand 0']
    %8 = vsyncpa [#allocation3], 0
    %s9 = scalar_lea.sflag [#allocation3], 1
    %10 = vsyncpa %s9, 0
    %11 = vsyncpa [#allocation6], 0
    %12 = vsyncpa [#allocation4], 0
    %s13 = scalar_lea.sflag [#allocation4], 1
    %14 = vsyncpa %s13, 0
    loop: start=0, step=1, limit=4
    $region2: #{tpu_custom_call.1} parent=1 // loop_pre_header
      _
    $region3: #{tpu_custom_call.1} parent=1 // loop_header
      %s16 = sphi 0, %s20
      %p17 = scmp.ge.s32.totalorder %s16, 4
      %s26 = sphi 0, %s28
      %s29 = sphi 0, %s26
      %s30 = sphi 0, %s29
      %s46 = sphi 0, %s30
      %s50 = sphi 0, %s50
      %s52 = sphi 0, %s50
      %s53 = sphi 0, %s52
      %s67 = sphi 0, %s53
      %s71 = sphi 0, %s71
      %s73 = sphi 0, %s71
      %s74 = sphi 0, %s73
      %s88 = sphi 0, %s74
      %s94 = sphi 0, %s96
      %s97 = sphi 0, %s94
      %s98 = sphi 0, %s97
      %s114 = sphi 0, %s98
    $region4: #{tpu_custom_call.1} parent=1 // loop_header_branch
      %19 = sbr.rel (%p17) target = $region8
    $region5: #{tpu_custom_call.1} parent=1 // loop_body
      %s21 = ssub.s32 %s16, 1
      %s22 = ssub.s32 %s16, 2
      %s23 = sadd.s32 %s16, 1
      %s24 = ssub.s32 %s16, %s23
      %p25 = scmp.eq.s32.totalorder %s24, 0
      %s27 = sadd.s32 %s26, 1
      %s28 = scalar_select %p25, %s26, %s27
      %p31 = pneg %p25
      %p32 = scmp.eq.s32.totalorder %s16, 1
      %p33 = por %p31, %p32
      %p34 = scmp.ne.s32.totalorder %s26, %s29
      %p35 = scmp.eq.s32.totalorder %s16, 0
      %p36 = por %p34, %p35
      %p37 = scmp.ne.s32.totalorder %s26, %s29
      %p38 = scmp.eq.s32.totalorder %s21, 1
      %p39 = por %p37, %p38
      %p40 = scmp.ne.s32.totalorder %s29, %s30
      %p41 = scmp.eq.s32.totalorder %s21, 0
      %p42 = por %p40, %p41
      %p43 = scmp.ne.s32.totalorder %s29, %s30
      %p44 = scmp.eq.s32.totalorder %s22, 1
      %p45 = por %p43, %p44
      %p47 = scmp.ne.s32.totalorder %s30, %s46
      %p48 = scmp.eq.s32.totalorder %s22, 0
      %p49 = por %p47, %p48
      %s51 = sadd.s32 %s50, 1
      %p54 = scmp.eq.s32.totalorder %s16, 1
      %p55 = scmp.ne.s32.totalorder %s50, %s52
      %p56 = scmp.eq.s32.totalorder %s16, 0
      %p57 = por %p55, %p56
      %p58 = scmp.ne.s32.totalorder %s50, %s52
      %p59 = scmp.eq.s32.totalorder %s21, 1
      %p60 = por %p58, %p59
      %p61 = scmp.ne.s32.totalorder %s52, %s53
      %p62 = scmp.eq.s32.totalorder %s21, 0
      %p63 = por %p61, %p62
      %p64 = scmp.ne.s32.totalorder %s52, %s53
      %p65 = scmp.eq.s32.totalorder %s22, 1
      %p66 = por %p64, %p65
      %p68 = scmp.ne.s32.totalorder %s53, %s67
      %p69 = scmp.eq.s32.totalorder %s22, 0
      %p70 = por %p68, %p69
      %s72 = sadd.s32 %s71, 1
      %p75 = scmp.eq.s32.totalorder %s16, 1
      %p76 = scmp.ne.s32.totalorder %s71, %s73
      %p77 = scmp.eq.s32.totalorder %s16, 0
      %p78 = por %p76, %p77
      %p79 = scmp.ne.s32.totalorder %s71, %s73
      %p80 = scmp.eq.s32.totalorder %s21, 1
      %p81 = por %p79, %p80
      %p82 = scmp.ne.s32.totalorder %s73, %s74
      %p83 = scmp.eq.s32.totalorder %s21, 0
      %p84 = por %p82, %p83
      %p85 = scmp.ne.s32.totalorder %s73, %s74
      %p86 = scmp.eq.s32.totalorder %s22, 1
      %p87 = por %p85, %p86
      %p89 = scmp.ne.s32.totalorder %s74, %s88
      %p90 = scmp.eq.s32.totalorder %s22, 0
      %p91 = por %p89, %p90
      %s92 = ssub.s32 %s16, %s23
      %p93 = scmp.eq.s32.totalorder %s92, 0
      %s95 = sadd.s32 %s94, 1
      %s96 = scalar_select %p93, %s94, %s95
      %p99 = pneg %p93
      %p100 = scmp.eq.s32.totalorder %s16, 1
      %p101 = por %p99, %p100
      %p102 = scmp.ne.s32.totalorder %s94, %s97
      %p103 = scmp.eq.s32.totalorder %s16, 0
      %p104 = por %p102, %p103
      %p105 = scmp.ne.s32.totalorder %s94, %s97
      %p106 = scmp.eq.s32.totalorder %s21, 1
      %p107 = por %p105, %p106
      %p108 = scmp.ne.s32.totalorder %s97, %s98
      %p109 = scmp.eq.s32.totalorder %s21, 0
      %p110 = por %p108, %p109
      %p111 = scmp.ne.s32.totalorder %s97, %s98
      %p112 = scmp.eq.s32.totalorder %s22, 1
      %p113 = por %p111, %p112
      %p115 = scmp.ne.s32.totalorder %s98, %s114
      %p116 = scmp.eq.s32.totalorder %s22, 0
      %p117 = por %p115, %p116
      %p118 = scmp.le.s32.totalorder 1, %s16
      %p119 = scmp.lt.s32.totalorder %s16, 3
      %p120 = pnand %p118, %p119
      %p121 = pneg %p120
      // Predicated region
      $region9: #{tpu_custom_call.1} parent=5 // pred_check
        _
      $region10: #{tpu_custom_call.1} parent=5 // pred_check_branch
        %123 = sbr.rel (%p120) target = $region12
      $region11: #{tpu_custom_call.1} parent=5 // pred_region
        %s124 = ssub.s32 %s16, 1
        // Predicated region
        $region13: #{tpu_custom_call.1} parent=11 // pred_check
          %p125 = pneg %p63
        $region14: #{tpu_custom_call.1} parent=11 // pred_check_branch
          %127 = sbr.rel (%p125) target = $region16
        $region15: #{tpu_custom_call.1} parent=11 // pred_region
          %129 = vsyncadd [#allocation6], 0
          %s130 = sshll.u32 %s1, 4
          %s131 = int_to_ptr.hbm [resolvable:$true] %s130
          %s132 = sshll.u32 [#allocation5], 4
          %s133 = int_to_ptr.vmem [resolvable:$true] %s132
          %138 = dma.hbm_to_vmem [thread:$0]  %s131, 2048, %s133, [#allocation6], 128, 128, 8
        $region16: #{tpu_custom_call.1} parent=11 // pred_fallthru
          _
        // Predicated region
        $region17: #{tpu_custom_call.1} parent=11 // pred_check
          %p139 = pneg %p84
        $region18: #{tpu_custom_call.1} parent=11 // pred_check_branch
          %141 = sbr.rel (%p139) target = $region20
        $region19: #{tpu_custom_call.1} parent=11 // pred_region
          %143 = vsyncadd [#allocation6], 0
          %s144 = sshll.u32 %s2, 4
          %s145 = int_to_ptr.hbm [resolvable:$true] %s144
          %s146 = sshll.u32 [#allocation7], 4
          %s147 = int_to_ptr.vmem [resolvable:$true] %s146
          %152 = dma.hbm_to_vmem [thread:$0]  %s145, 2048, %s147, [#allocation6], 128, 128, 8
        $region20: #{tpu_custom_call.1} parent=11 // pred_fallthru
          _
      $region12: #{tpu_custom_call.1} parent=5 // pred_fallthru
        _
      %p153 = scmp.lt.s32.totalorder %s16, 2
      // Predicated region
      $region21: #{tpu_custom_call.1} parent=5 // pred_check
        %p154 = pneg %p153
      $region22: #{tpu_custom_call.1} parent=5 // pred_check_branch
        %156 = sbr.rel (%p154) target = $region24
      $region23: #{tpu_custom_call.1} parent=5 // pred_region
        // Predicated region
        $region25: #{tpu_custom_call.1} parent=23 // pred_check
          %p157 = pneg %p36
        $region26: #{tpu_custom_call.1} parent=23 // pred_check_branch
          %159 = sbr.rel (%p157) target = $region28
        $region27: #{tpu_custom_call.1} parent=23 // pred_region
          %s160 = sand.u32 %s26, 1
          %s161 = scalar_lea.sflag [#allocation3], %s160
          %s162 = sand.u32 %s26, 1
          %s163 = smul.addr %s162, 256
          %s164 = scalar_lea.vmem [#allocation2], %s163
          %s165 = smul.u32 32, %s16
          %167 = vsyncadd %s161, 0
          %s168 = smul.addr %s165, 8
          %s169 = scalar_lea.hbm %s0, %s168
          %s170 = sshll.u32 %s169, 4
          %s171 = int_to_ptr.hbm [resolvable:$true] %s170
          %s172 = sshll.u32 %s164, 4
          %s173 = int_to_ptr.vmem [resolvable:$true] %s172
          %178 = dma.hbm_to_vmem [thread:$0]  %s171, 4096, %s173, %s161, 128, 128, 8
        $region28: #{tpu_custom_call.1} parent=23 // pred_fallthru
          _
      $region24: #{tpu_custom_call.1} parent=5 // pred_fallthru
        _
      %p179 = scmp.le.s32.totalorder 1, %s16
      %p180 = scmp.lt.s32.totalorder %s16, 3
      %p181 = pnand %p179, %p180
      %p182 = pneg %p181
      // Predicated region
      $region29: #{tpu_custom_call.1} parent=5 // pred_check
        _
      $region30: #{tpu_custom_call.1} parent=5 // pred_check_branch
        %184 = sbr.rel (%p181) target = $region32
      $region31: #{tpu_custom_call.1} parent=5 // pred_region
        %s185 = ssub.s32 %s16, 1
        %s186 = sand.u32 %s29, 1
        %s187 = scalar_lea.sflag [#allocation3], %s186
        %s188 = sand.u32 %s29, 1
        %s189 = smul.addr %s188, 256
        %s190 = scalar_lea.vmem [#allocation2], %s189
        // Predicated region
        $region33: #{tpu_custom_call.1} parent=31 // pred_check
          %p191 = pneg %p42
        $region34: #{tpu_custom_call.1} parent=31 // pred_check_branch
          %193 = sbr.rel (%p191) target = $region36
        $region35: #{tpu_custom_call.1} parent=31 // pred_region
          %195 = dma.done %s187, 4096
        $region36: #{tpu_custom_call.1} parent=31 // pred_fallthru
          _
        // Predicated region
        $region37: #{tpu_custom_call.1} parent=31 // pred_check
          %p196 = pneg %p63
        $region38: #{tpu_custom_call.1} parent=31 // pred_check_branch
          %198 = sbr.rel (%p196) target = $region40
        $region39: #{tpu_custom_call.1} parent=31 // pred_region
          %200 = dma.done [#allocation6], 2048
        $region40: #{tpu_custom_call.1} parent=31 // pred_fallthru
          _
        // Predicated region
        $region41: #{tpu_custom_call.1} parent=31 // pred_check
          %p201 = pneg %p84
        $region42: #{tpu_custom_call.1} parent=31 // pred_check_branch
          %203 = sbr.rel (%p201) target = $region44
        $region43: #{tpu_custom_call.1} parent=31 // pred_region
          %205 = dma.done [#allocation6], 2048
        $region44: #{tpu_custom_call.1} parent=31 // pred_fallthru
          _
        %s206 = sand.u32 %s29, 1
        %s207 = scalar_lea.sflag [#allocation3], %s206
        %s208 = sand.u32 %s29, 1
        %s209 = smul.addr %s208, 256
        %s210 = scalar_lea.vmem [#allocation2], %s209
        %p211 = pneg %p42
        %p212 = pneg %p39
        %p213 = pneg %p63
        %p214 = pneg %p60
        %p215 = pneg %p84
        %p216 = pneg %p81
        %p217 = pneg %p110
        %p218 = pneg %p107
        %s219 = sand.u32 %s97, 1
        %s220 = scalar_lea.sflag [#allocation4], %s219
        %s221 = sand.u32 %s97, 1
        %s222 = smul.addr %s221, 256
        %s223 = scalar_lea.vmem [#allocation8], %s222
        %s224 = smul.u32 32, %s21
        %s225 = smul.u32 32, %s21
        %v226 = vld [vmem:[%s190] sm:$0xff]
        %v227 = vld [vmem:[%s190 + $0x8] sm:$0xff]
        %v228 = vld [vmem:[%s190 + $0x10] sm:$0xff]
        %v229 = vld [vmem:[%s190 + $0x18] sm:$0xff]
        %v230 = vld [vmem:[%s190 + $0x20] sm:$0xff]
        %v231 = vld [vmem:[%s190 + $0x28] sm:$0xff]
        %v232 = vld [vmem:[%s190 + $0x30] sm:$0xff]
        %v233 = vld [vmem:[%s190 + $0x38] sm:$0xff]
        %v234 = vld [vmem:[%s190 + $0x40] sm:$0xff]
        %v235 = vld [vmem:[%s190 + $0x48] sm:$0xff]
        %v236 = vld [vmem:[%s190 + $0x50] sm:$0xff]
        %v237 = vld [vmem:[%s190 + $0x58] sm:$0xff]
        %v238 = vld [vmem:[%s190 + $0x60] sm:$0xff]
        %v239 = vld [vmem:[%s190 + $0x68] sm:$0xff]
        %v240 = vld [vmem:[%s190 + $0x70] sm:$0xff]
        %v241 = vld [vmem:[%s190 + $0x78] sm:$0xff]
        %v242 = vld [vmem:[%s190 + $0x80] sm:$0xff]
        %v243 = vld [vmem:[%s190 + $0x88] sm:$0xff]
        %v244 = vld [vmem:[%s190 + $0x90] sm:$0xff]
        %v245 = vld [vmem:[%s190 + $0x98] sm:$0xff]
        %v246 = vld [vmem:[%s190 + $0xa0] sm:$0xff]
        %v247 = vld [vmem:[%s190 + $0xa8] sm:$0xff]
        %v248 = vld [vmem:[%s190 + $0xb0] sm:$0xff]
        %v249 = vld [vmem:[%s190 + $0xb8] sm:$0xff]
        %v250 = vld [vmem:[%s190 + $0xc0] sm:$0xff]
        %v251 = vld [vmem:[%s190 + $0xc8] sm:$0xff]
        %v252 = vld [vmem:[%s190 + $0xd0] sm:$0xff]
        %v253 = vld [vmem:[%s190 + $0xd8] sm:$0xff]
        %v254 = vld [vmem:[%s190 + $0xe0] sm:$0xff]
        %v255 = vld [vmem:[%s190 + $0xe8] sm:$0xff]
        %v256 = vld [vmem:[%s190 + $0xf0] sm:$0xff]
        %v257 = vld [vmem:[%s190 + $0xf8] sm:$0xff]
        %v258 = vld [vmem:[#allocation5] sm:$0xff]
        %v259 = vld [vmem:[#allocation5 + $0x8] sm:$0xff]
        %v260 = vld [vmem:[#allocation5 + $0x10] sm:$0xff]
        %v261 = vld [vmem:[#allocation5 + $0x18] sm:$0xff]
        %v262 = vld [vmem:[#allocation5 + $0x20] sm:$0xff]
        %v263 = vld [vmem:[#allocation5 + $0x28] sm:$0xff]
        %v264 = vld [vmem:[#allocation5 + $0x30] sm:$0xff]
        %v265 = vld [vmem:[#allocation5 + $0x38] sm:$0xff]
        %v266 = vld [vmem:[#allocation5 + $0x40] sm:$0xff]
        %v267 = vld [vmem:[#allocation5 + $0x48] sm:$0xff]
        %v268 = vld [vmem:[#allocation5 + $0x50] sm:$0xff]
        %v269 = vld [vmem:[#allocation5 + $0x58] sm:$0xff]
        %v270 = vld [vmem:[#allocation5 + $0x60] sm:$0xff]
        %v271 = vld [vmem:[#allocation5 + $0x68] sm:$0xff]
        %v272 = vld [vmem:[#allocation5 + $0x70] sm:$0xff]
        %v273 = vld [vmem:[#allocation5 + $0x78] sm:$0xff]
        %274 = vmatpush.msra.mxu0 %v273
        %275 = vmatpush.msra.mxu0 %v272
        %276 = vmatpush.msra.mxu0 %v271
        %277 = vmatpush.msra.mxu0 %v270
        %278 = vmatpush.msra.mxu0 %v269
        %279 = vmatpush.msra.mxu0 %v268
        %280 = vmatpush.msra.mxu0 %v267
        %281 = vmatpush.msra.mxu0 %v266
        %282 = vmatpush.msra.mxu0 %v265
        %283 = vmatpush.msra.mxu0 %v264
        %284 = vmatpush.msra.mxu0 %v263
        %285 = vmatpush.msra.mxu0 %v262
        %286 = vmatpush.msra.mxu0 %v261
        %287 = vmatpush.msra.mxu0 %v260
        %288 = vmatpush.msra.mxu0 %v259
        %289 = vmatpush.msra.mxu0 %v258
        %290 = vmatmul.f32.gmra.mxu0 %v226
        %v291 = vpop.f32.mrf.mxu0
        %v292 = vadd.f32 0.0, %v291
        %293 = vmatmul.f32.gmra.mxu0 %v227
        %v294 = vpop.f32.mrf.mxu0
        %v295 = vadd.f32 0.0, %v294
        %296 = vmatmul.f32.gmra.mxu0 %v228
        %v297 = vpop.f32.mrf.mxu0
        %v298 = vadd.f32 0.0, %v297
        %299 = vmatmul.f32.gmra.mxu0 %v229
        %v300 = vpop.f32.mrf.mxu0
        %v301 = vadd.f32 0.0, %v300
        %302 = vmatmul.f32.gmra.mxu0 %v230
        %v303 = vpop.f32.mrf.mxu0
        %v304 = vadd.f32 0.0, %v303
        %305 = vmatmul.f32.gmra.mxu0 %v231
        %v306 = vpop.f32.mrf.mxu0
        %v307 = vadd.f32 0.0, %v306
        %308 = vmatmul.f32.gmra.mxu0 %v232
        %v309 = vpop.f32.mrf.mxu0
        %v310 = vadd.f32 0.0, %v309
        %311 = vmatmul.f32.gmra.mxu0 %v233
        %v312 = vpop.f32.mrf.mxu0
        %v313 = vadd.f32 0.0, %v312
        %314 = vmatmul.f32.gmra.mxu0 %v234
        %v315 = vpop.f32.mrf.mxu0
        %v316 = vadd.f32 0.0, %v315
        %317 = vmatmul.f32.gmra.mxu0 %v235
        %v318 = vpop.f32.mrf.mxu0
        %v319 = vadd.f32 0.0, %v318
        %320 = vmatmul.f32.gmra.mxu0 %v236
        %v321 = vpop.f32.mrf.mxu0
        %v322 = vadd.f32 0.0, %v321
        %323 = vmatmul.f32.gmra.mxu0 %v237
        %v324 = vpop.f32.mrf.mxu0
        %v325 = vadd.f32 0.0, %v324
        %326 = vmatmul.f32.gmra.mxu0 %v238
        %v327 = vpop.f32.mrf.mxu0
        %v328 = vadd.f32 0.0, %v327
        %329 = vmatmul.f32.gmra.mxu0 %v239
        %v330 = vpop.f32.mrf.mxu0
        %v331 = vadd.f32 0.0, %v330
        %332 = vmatmul.f32.gmra.mxu0 %v240
        %v333 = vpop.f32.mrf.mxu0
        %v334 = vadd.f32 0.0, %v333
        %335 = vmatmul.f32.gmra.mxu0 %v241
        %v336 = vpop.f32.mrf.mxu0
        %v337 = vadd.f32 0.0, %v336
        %338 = vmatmul.f32.gmra.mxu0 %v242
        %v339 = vpop.f32.mrf.mxu0
        %v340 = vadd.f32 0.0, %v339
        %341 = vmatmul.f32.gmra.mxu0 %v243
        %v342 = vpop.f32.mrf.mxu0
        %v343 = vadd.f32 0.0, %v342
        %344 = vmatmul.f32.gmra.mxu0 %v244
        %v345 = vpop.f32.mrf.mxu0
        %v346 = vadd.f32 0.0, %v345
        %347 = vmatmul.f32.gmra.mxu0 %v245
        %v348 = vpop.f32.mrf.mxu0
        %v349 = vadd.f32 0.0, %v348
        %350 = vmatmul.f32.gmra.mxu0 %v246
        %v351 = vpop.f32.mrf.mxu0
        %v352 = vadd.f32 0.0, %v351
        %353 = vmatmul.f32.gmra.mxu0 %v247
        %v354 = vpop.f32.mrf.mxu0
        %v355 = vadd.f32 0.0, %v354
        %356 = vmatmul.f32.gmra.mxu0 %v248
        %v357 = vpop.f32.mrf.mxu0
        %v358 = vadd.f32 0.0, %v357
        %359 = vmatmul.f32.gmra.mxu0 %v249
        %v360 = vpop.f32.mrf.mxu0
        %v361 = vadd.f32 0.0, %v360
        %362 = vmatmul.f32.gmra.mxu0 %v250
        %v363 = vpop.f32.mrf.mxu0
        %v364 = vadd.f32 0.0, %v363
        %365 = vmatmul.f32.gmra.mxu0 %v251
        %v366 = vpop.f32.mrf.mxu0
        %v367 = vadd.f32 0.0, %v366
        %368 = vmatmul.f32.gmra.mxu0 %v252
        %v369 = vpop.f32.mrf.mxu0
        %v370 = vadd.f32 0.0, %v369
        %371 = vmatmul.f32.gmra.mxu0 %v253
        %v372 = vpop.f32.mrf.mxu0
        %v373 = vadd.f32 0.0, %v372
        %374 = vmatmul.f32.gmra.mxu0 %v254
        %v375 = vpop.f32.mrf.mxu0
        %v376 = vadd.f32 0.0, %v375
        %377 = vmatmul.f32.gmra.mxu0 %v255
        %v378 = vpop.f32.mrf.mxu0
        %v379 = vadd.f32 0.0, %v378
        %380 = vmatmul.f32.gmra.mxu0 %v256
        %v381 = vpop.f32.mrf.mxu0
        %v382 = vadd.f32 0.0, %v381
        %383 = vmatmul.f32.gmra.mxu0 %v257
        %v384 = vpop.f32.mrf.mxu0
        %v385 = vadd.f32 0.0, %v384
        %386 = vdwg.mxu0
        %v387 = vlaneseq
        %v388 = vand.u32 %v387, 127
        %389 = vmin.xlane.f32.xlu0 %v292
        %v390 = vpop.xlane.xlu0 %389
        %391 = vmin.xlane.f32.xlu0 %v295
        %v392 = vpop.xlane.xlu0 %391
        %393 = vmin.xlane.f32.xlu0 %v298
        %v394 = vpop.xlane.xlu0 %393
        %395 = vmin.xlane.f32.xlu0 %v301
        %v396 = vpop.xlane.xlu0 %395
        %397 = vmin.xlane.f32.xlu0 %v304
        %v398 = vpop.xlane.xlu0 %397
        %399 = vmin.xlane.f32.xlu0 %v307
        %v400 = vpop.xlane.xlu0 %399
        %401 = vmin.xlane.f32.xlu0 %v310
        %v402 = vpop.xlane.xlu0 %401
        %403 = vmin.xlane.f32.xlu0 %v313
        %v404 = vpop.xlane.xlu0 %403
        %405 = vmin.xlane.f32.xlu0 %v316
        %v406 = vpop.xlane.xlu0 %405
        %407 = vmin.xlane.f32.xlu0 %v319
        %v408 = vpop.xlane.xlu0 %407
        %409 = vmin.xlane.f32.xlu0 %v322
        %v410 = vpop.xlane.xlu0 %409
        %411 = vmin.xlane.f32.xlu0 %v325
        %v412 = vpop.xlane.xlu0 %411
        %413 = vmin.xlane.f32.xlu0 %v328
        %v414 = vpop.xlane.xlu0 %413
        %415 = vmin.xlane.f32.xlu0 %v331
        %v416 = vpop.xlane.xlu0 %415
        %417 = vmin.xlane.f32.xlu0 %v334
        %v418 = vpop.xlane.xlu0 %417
        %419 = vmin.xlane.f32.xlu0 %v337
        %v420 = vpop.xlane.xlu0 %419
        %421 = vmin.xlane.f32.xlu0 %v340
        %v422 = vpop.xlane.xlu0 %421
        %423 = vmin.xlane.f32.xlu0 %v343
        %v424 = vpop.xlane.xlu0 %423
        %425 = vmin.xlane.f32.xlu0 %v346
        %v426 = vpop.xlane.xlu0 %425
        %427 = vmin.xlane.f32.xlu0 %v349
        %v428 = vpop.xlane.xlu0 %427
        %429 = vmin.xlane.f32.xlu0 %v352
        %v430 = vpop.xlane.xlu0 %429
        %431 = vmin.xlane.f32.xlu0 %v355
        %v432 = vpop.xlane.xlu0 %431
        %433 = vmin.xlane.f32.xlu0 %v358
        %v434 = vpop.xlane.xlu0 %433
        %435 = vmin.xlane.f32.xlu0 %v361
        %v436 = vpop.xlane.xlu0 %435
        %437 = vmin.xlane.f32.xlu0 %v364
        %v438 = vpop.xlane.xlu0 %437
        %439 = vmin.xlane.f32.xlu0 %v367
        %v440 = vpop.xlane.xlu0 %439
        %441 = vmin.xlane.f32.xlu0 %v370
        %v442 = vpop.xlane.xlu0 %441
        %443 = vmin.xlane.f32.xlu0 %v373
        %v444 = vpop.xlane.xlu0 %443
        %445 = vmin.xlane.f32.xlu0 %v376
        %v446 = vpop.xlane.xlu0 %445
        %447 = vmin.xlane.f32.xlu0 %v379
        %v448 = vpop.xlane.xlu0 %447
        %449 = vmin.xlane.f32.xlu0 %v382
        %v450 = vpop.xlane.xlu0 %449
        %451 = vmin.xlane.f32.xlu0 %v385
        %v452 = vpop.xlane.xlu0 %451
        %vm453 = vcmp.eq.f32.partialorder %v292, %v390
        %vm454 = vcmp.eq.f32.partialorder %v295, %v392
        %vm455 = vcmp.eq.f32.partialorder %v298, %v394
        %vm456 = vcmp.eq.f32.partialorder %v301, %v396
        %vm457 = vcmp.eq.f32.partialorder %v304, %v398
        %vm458 = vcmp.eq.f32.partialorder %v307, %v400
        %vm459 = vcmp.eq.f32.partialorder %v310, %v402
        %vm460 = vcmp.eq.f32.partialorder %v313, %v404
        %vm461 = vcmp.eq.f32.partialorder %v316, %v406
        %vm462 = vcmp.eq.f32.partialorder %v319, %v408
        %vm463 = vcmp.eq.f32.partialorder %v322, %v410
        %vm464 = vcmp.eq.f32.partialorder %v325, %v412
        %vm465 = vcmp.eq.f32.partialorder %v328, %v414
        %vm466 = vcmp.eq.f32.partialorder %v331, %v416
        %vm467 = vcmp.eq.f32.partialorder %v334, %v418
        %vm468 = vcmp.eq.f32.partialorder %v337, %v420
        %vm469 = vcmp.eq.f32.partialorder %v340, %v422
        %vm470 = vcmp.eq.f32.partialorder %v343, %v424
        %vm471 = vcmp.eq.f32.partialorder %v346, %v426
        %vm472 = vcmp.eq.f32.partialorder %v349, %v428
        %vm473 = vcmp.eq.f32.partialorder %v352, %v430
        %vm474 = vcmp.eq.f32.partialorder %v355, %v432
        %vm475 = vcmp.eq.f32.partialorder %v358, %v434
        %vm476 = vcmp.eq.f32.partialorder %v361, %v436
        %vm477 = vcmp.eq.f32.partialorder %v364, %v438
        %vm478 = vcmp.eq.f32.partialorder %v367, %v440
        %vm479 = vcmp.eq.f32.partialorder %v370, %v442
        %vm480 = vcmp.eq.f32.partialorder %v373, %v444
        %vm481 = vcmp.eq.f32.partialorder %v376, %v446
        %vm482 = vcmp.eq.f32.partialorder %v379, %v448
        %vm483 = vcmp.eq.f32.partialorder %v382, %v450
        %vm484 = vcmp.eq.f32.partialorder %v385, %v452
        %v485 = vsel %vm453, %v388, 128
        %v486 = vsel %vm454, %v388, 128
        %v487 = vsel %vm455, %v388, 128
        %v488 = vsel %vm456, %v388, 128
        %v489 = vsel %vm457, %v388, 128
        %v490 = vsel %vm458, %v388, 128
        %v491 = vsel %vm459, %v388, 128
        %v492 = vsel %vm460, %v388, 128
        %v493 = vsel %vm461, %v388, 128
        %v494 = vsel %vm462, %v388, 128
        %v495 = vsel %vm463, %v388, 128
        %v496 = vsel %vm464, %v388, 128
        %v497 = vsel %vm465, %v388, 128
        %v498 = vsel %vm466, %v388, 128
        %v499 = vsel %vm467, %v388, 128
        %v500 = vsel %vm468, %v388, 128
        %v501 = vsel %vm469, %v388, 128
        %v502 = vsel %vm470, %v388, 128
        %v503 = vsel %vm471, %v388, 128
        %v504 = vsel %vm472, %v388, 128
        %v505 = vsel %vm473, %v388, 128
        %v506 = vsel %vm474, %v388, 128
        %v507 = vsel %vm475, %v388, 128
        %v508 = vsel %vm476, %v388, 128
        %v509 = vsel %vm477, %v388, 128
        %v510 = vsel %vm478, %v388, 128
        %v511 = vsel %vm479, %v388, 128
        %v512 = vsel %vm480, %v388, 128
        %v513 = vsel %vm481, %v388, 128
        %v514 = vsel %vm482, %v388, 128
        %v515 = vsel %vm483, %v388, 128
        %v516 = vsel %vm484, %v388, 128
        %v517 = vand.u32 %v485, 65535
        %v518 = vshra.s32 %v485, 16
        %v519 = vcvt.s32.f32 %v517
        %v520 = vcvt.s32.f32 %v518
        %521 = vmin.xlane.f32.xlu0 %v520
        %v522 = vpop.xlane.xlu0 %521
        %vm523 = vcmp.eq.f32.partialorder %v520, %v522
        %v524 = vsel %vm523, %v519, inf
        %525 = vmin.xlane.f32.xlu0 %v524
        %v526 = vpop.xlane.xlu0 %525
        %v527 = vcvt.f32.s32 %v526
        %v528 = vcvt.f32.s32 %v522
        %v529 = vshll.u32 %v528, 16
        %v530 = vadd.s32 %v529, %v527
        %v531 = vand.u32 %v486, 65535
        %v532 = vshra.s32 %v486, 16
        %v533 = vcvt.s32.f32 %v531
        %v534 = vcvt.s32.f32 %v532
        %535 = vmin.xlane.f32.xlu0 %v534
        %v536 = vpop.xlane.xlu0 %535
        %vm537 = vcmp.eq.f32.partialorder %v534, %v536
        %v538 = vsel %vm537, %v533, inf
        %539 = vmin.xlane.f32.xlu0 %v538
        %v540 = vpop.xlane.xlu0 %539
        %v541 = vcvt.f32.s32 %v540
        %v542 = vcvt.f32.s32 %v536
        %v543 = vshll.u32 %v542, 16
        %v544 = vadd.s32 %v543, %v541
        %v545 = vand.u32 %v487, 65535
        %v546 = vshra.s32 %v487, 16
        %v547 = vcvt.s32.f32 %v545
        %v548 = vcvt.s32.f32 %v546
        %549 = vmin.xlane.f32.xlu0 %v548
        %v550 = vpop.xlane.xlu0 %549
        %vm551 = vcmp.eq.f32.partialorder %v548, %v550
        %v552 = vsel %vm551, %v547, inf
        %553 = vmin.xlane.f32.xlu0 %v552
        %v554 = vpop.xlane.xlu0 %553
        %v555 = vcvt.f32.s32 %v554
        %v556 = vcvt.f32.s32 %v550
        %v557 = vshll.u32 %v556, 16
        %v558 = vadd.s32 %v557, %v555
        %v559 = vand.u32 %v488, 65535
        %v560 = vshra.s32 %v488, 16
        %v561 = vcvt.s32.f32 %v559
        %v562 = vcvt.s32.f32 %v560
        %563 = vmin.xlane.f32.xlu0 %v562
        %v564 = vpop.xlane.xlu0 %563
        %vm565 = vcmp.eq.f32.partialorder %v562, %v564
        %v566 = vsel %vm565, %v561, inf
        %567 = vmin.xlane.f32.xlu0 %v566
        %v568 = vpop.xlane.xlu0 %567
        %v569 = vcvt.f32.s32 %v568
        %v570 = vcvt.f32.s32 %v564
        %v571 = vshll.u32 %v570, 16
        %v572 = vadd.s32 %v571, %v569
        %v573 = vand.u32 %v489, 65535
        %v574 = vshra.s32 %v489, 16
        %v575 = vcvt.s32.f32 %v573
        %v576 = vcvt.s32.f32 %v574
        %577 = vmin.xlane.f32.xlu0 %v576
        %v578 = vpop.xlane.xlu0 %577
        %vm579 = vcmp.eq.f32.partialorder %v576, %v578
        %v580 = vsel %vm579, %v575, inf
        %581 = vmin.xlane.f32.xlu0 %v580
        %v582 = vpop.xlane.xlu0 %581
        %v583 = vcvt.f32.s32 %v582
        %v584 = vcvt.f32.s32 %v578
        %v585 = vshll.u32 %v584, 16
        %v586 = vadd.s32 %v585, %v583
        %v587 = vand.u32 %v490, 65535
        %v588 = vshra.s32 %v490, 16
        %v589 = vcvt.s32.f32 %v587
        %v590 = vcvt.s32.f32 %v588
        %591 = vmin.xlane.f32.xlu0 %v590
        %v592 = vpop.xlane.xlu0 %591
        %vm593 = vcmp.eq.f32.partialorder %v590, %v592
        %v594 = vsel %vm593, %v589, inf
        %595 = vmin.xlane.f32.xlu0 %v594
        %v596 = vpop.xlane.xlu0 %595
        %v597 = vcvt.f32.s32 %v596
        %v598 = vcvt.f32.s32 %v592
        %v599 = vshll.u32 %v598, 16
        %v600 = vadd.s32 %v599, %v597
        %v601 = vand.u32 %v491, 65535
        %v602 = vshra.s32 %v491, 16
        %v603 = vcvt.s32.f32 %v601
        %v604 = vcvt.s32.f32 %v602
        %605 = vmin.xlane.f32.xlu0 %v604
        %v606 = vpop.xlane.xlu0 %605
        %vm607 = vcmp.eq.f32.partialorder %v604, %v606
        %v608 = vsel %vm607, %v603, inf
        %609 = vmin.xlane.f32.xlu0 %v608
        %v610 = vpop.xlane.xlu0 %609
        %v611 = vcvt.f32.s32 %v610
        %v612 = vcvt.f32.s32 %v606
        %v613 = vshll.u32 %v612, 16
        %v614 = vadd.s32 %v613, %v611
        %v615 = vand.u32 %v492, 65535
        %v616 = vshra.s32 %v492, 16
        %v617 = vcvt.s32.f32 %v615
        %v618 = vcvt.s32.f32 %v616
        %619 = vmin.xlane.f32.xlu0 %v618
        %v620 = vpop.xlane.xlu0 %619
        %vm621 = vcmp.eq.f32.partialorder %v618, %v620
        %v622 = vsel %vm621, %v617, inf
        %623 = vmin.xlane.f32.xlu0 %v622
        %v624 = vpop.xlane.xlu0 %623
        %v625 = vcvt.f32.s32 %v624
        %v626 = vcvt.f32.s32 %v620
        %v627 = vshll.u32 %v626, 16
        %v628 = vadd.s32 %v627, %v625
        %v629 = vand.u32 %v493, 65535
        %v630 = vshra.s32 %v493, 16
        %v631 = vcvt.s32.f32 %v629
        %v632 = vcvt.s32.f32 %v630
        %633 = vmin.xlane.f32.xlu0 %v632
        %v634 = vpop.xlane.xlu0 %633
        %vm635 = vcmp.eq.f32.partialorder %v632, %v634
        %v636 = vsel %vm635, %v631, inf
        %637 = vmin.xlane.f32.xlu0 %v636
        %v638 = vpop.xlane.xlu0 %637
        %v639 = vcvt.f32.s32 %v638
        %v640 = vcvt.f32.s32 %v634
        %v641 = vshll.u32 %v640, 16
        %v642 = vadd.s32 %v641, %v639
        %v643 = vand.u32 %v494, 65535
        %v644 = vshra.s32 %v494, 16
        %v645 = vcvt.s32.f32 %v643
        %v646 = vcvt.s32.f32 %v644
        %647 = vmin.xlane.f32.xlu0 %v646
        %v648 = vpop.xlane.xlu0 %647
        %vm649 = vcmp.eq.f32.partialorder %v646, %v648
        %v650 = vsel %vm649, %v645, inf
        %651 = vmin.xlane.f32.xlu0 %v650
        %v652 = vpop.xlane.xlu0 %651
        %v653 = vcvt.f32.s32 %v652
        %v654 = vcvt.f32.s32 %v648
        %v655 = vshll.u32 %v654, 16
        %v656 = vadd.s32 %v655, %v653
        %v657 = vand.u32 %v495, 65535
        %v658 = vshra.s32 %v495, 16
        %v659 = vcvt.s32.f32 %v657
        %v660 = vcvt.s32.f32 %v658
        %661 = vmin.xlane.f32.xlu0 %v660
        %v662 = vpop.xlane.xlu0 %661
        %vm663 = vcmp.eq.f32.partialorder %v660, %v662
        %v664 = vsel %vm663, %v659, inf
        %665 = vmin.xlane.f32.xlu0 %v664
        %v666 = vpop.xlane.xlu0 %665
        %v667 = vcvt.f32.s32 %v666
        %v668 = vcvt.f32.s32 %v662
        %v669 = vshll.u32 %v668, 16
        %v670 = vadd.s32 %v669, %v667
        %v671 = vand.u32 %v496, 65535
        %v672 = vshra.s32 %v496, 16
        %v673 = vcvt.s32.f32 %v671
        %v674 = vcvt.s32.f32 %v672
        %675 = vmin.xlane.f32.xlu0 %v674
        %v676 = vpop.xlane.xlu0 %675
        %vm677 = vcmp.eq.f32.partialorder %v674, %v676
        %v678 = vsel %vm677, %v673, inf
        %679 = vmin.xlane.f32.xlu0 %v678
        %v680 = vpop.xlane.xlu0 %679
        %v681 = vcvt.f32.s32 %v680
        %v682 = vcvt.f32.s32 %v676
        %v683 = vshll.u32 %v682, 16
        %v684 = vadd.s32 %v683, %v681
        %v685 = vand.u32 %v497, 65535
        %v686 = vshra.s32 %v497, 16
        %v687 = vcvt.s32.f32 %v685
        %v688 = vcvt.s32.f32 %v686
        %689 = vmin.xlane.f32.xlu0 %v688
        %v690 = vpop.xlane.xlu0 %689
        %vm691 = vcmp.eq.f32.partialorder %v688, %v690
        %v692 = vsel %vm691, %v687, inf
        %693 = vmin.xlane.f32.xlu0 %v692
        %v694 = vpop.xlane.xlu0 %693
        %v695 = vcvt.f32.s32 %v694
        %v696 = vcvt.f32.s32 %v690
        %v697 = vshll.u32 %v696, 16
        %v698 = vadd.s32 %v697, %v695
        %v699 = vand.u32 %v498, 65535
        %v700 = vshra.s32 %v498, 16
        %v701 = vcvt.s32.f32 %v699
        %v702 = vcvt.s32.f32 %v700
        %703 = vmin.xlane.f32.xlu0 %v702
        %v704 = vpop.xlane.xlu0 %703
        %vm705 = vcmp.eq.f32.partialorder %v702, %v704
        %v706 = vsel %vm705, %v701, inf
        %707 = vmin.xlane.f32.xlu0 %v706
        %v708 = vpop.xlane.xlu0 %707
        %v709 = vcvt.f32.s32 %v708
        %v710 = vcvt.f32.s32 %v704
        %v711 = vshll.u32 %v710, 16
        %v712 = vadd.s32 %v711, %v709
        %v713 = vand.u32 %v499, 65535
        %v714 = vshra.s32 %v499, 16
        %v715 = vcvt.s32.f32 %v713
        %v716 = vcvt.s32.f32 %v714
        %717 = vmin.xlane.f32.xlu0 %v716
        %v718 = vpop.xlane.xlu0 %717
        %vm719 = vcmp.eq.f32.partialorder %v716, %v718
        %v720 = vsel %vm719, %v715, inf
        %721 = vmin.xlane.f32.xlu0 %v720
        %v722 = vpop.xlane.xlu0 %721
        %v723 = vcvt.f32.s32 %v722
        %v724 = vcvt.f32.s32 %v718
        %v725 = vshll.u32 %v724, 16
        %v726 = vadd.s32 %v725, %v723
        %v727 = vand.u32 %v500, 65535
        %v728 = vshra.s32 %v500, 16
        %v729 = vcvt.s32.f32 %v727
        %v730 = vcvt.s32.f32 %v728
        %731 = vmin.xlane.f32.xlu0 %v730
        %v732 = vpop.xlane.xlu0 %731
        %vm733 = vcmp.eq.f32.partialorder %v730, %v732
        %v734 = vsel %vm733, %v729, inf
        %735 = vmin.xlane.f32.xlu0 %v734
        %v736 = vpop.xlane.xlu0 %735
        %v737 = vcvt.f32.s32 %v736
        %v738 = vcvt.f32.s32 %v732
        %v739 = vshll.u32 %v738, 16
        %v740 = vadd.s32 %v739, %v737
        %v741 = vand.u32 %v501, 65535
        %v742 = vshra.s32 %v501, 16
        %v743 = vcvt.s32.f32 %v741
        %v744 = vcvt.s32.f32 %v742
        %745 = vmin.xlane.f32.xlu0 %v744
        %v746 = vpop.xlane.xlu0 %745
        %vm747 = vcmp.eq.f32.partialorder %v744, %v746
        %v748 = vsel %vm747, %v743, inf
        %749 = vmin.xlane.f32.xlu0 %v748
        %v750 = vpop.xlane.xlu0 %749
        %v751 = vcvt.f32.s32 %v750
        %v752 = vcvt.f32.s32 %v746
        %v753 = vshll.u32 %v752, 16
        %v754 = vadd.s32 %v753, %v751
        %v755 = vand.u32 %v502, 65535
        %v756 = vshra.s32 %v502, 16
        %v757 = vcvt.s32.f32 %v755
        %v758 = vcvt.s32.f32 %v756
        %759 = vmin.xlane.f32.xlu0 %v758
        %v760 = vpop.xlane.xlu0 %759
        %vm761 = vcmp.eq.f32.partialorder %v758, %v760
        %v762 = vsel %vm761, %v757, inf
        %763 = vmin.xlane.f32.xlu0 %v762
        %v764 = vpop.xlane.xlu0 %763
        %v765 = vcvt.f32.s32 %v764
        %v766 = vcvt.f32.s32 %v760
        %v767 = vshll.u32 %v766, 16
        %v768 = vadd.s32 %v767, %v765
        %v769 = vand.u32 %v503, 65535
        %v770 = vshra.s32 %v503, 16
        %v771 = vcvt.s32.f32 %v769
        %v772 = vcvt.s32.f32 %v770
        %773 = vmin.xlane.f32.xlu0 %v772
        %v774 = vpop.xlane.xlu0 %773
        %vm775 = vcmp.eq.f32.partialorder %v772, %v774
        %v776 = vsel %vm775, %v771, inf
        %777 = vmin.xlane.f32.xlu0 %v776
        %v778 = vpop.xlane.xlu0 %777
        %v779 = vcvt.f32.s32 %v778
        %v780 = vcvt.f32.s32 %v774
        %v781 = vshll.u32 %v780, 16
        %v782 = vadd.s32 %v781, %v779
        %v783 = vand.u32 %v504, 65535
        %v784 = vshra.s32 %v504, 16
        %v785 = vcvt.s32.f32 %v783
        %v786 = vcvt.s32.f32 %v784
        %787 = vmin.xlane.f32.xlu0 %v786
        %v788 = vpop.xlane.xlu0 %787
        %vm789 = vcmp.eq.f32.partialorder %v786, %v788
        %v790 = vsel %vm789, %v785, inf
        %791 = vmin.xlane.f32.xlu0 %v790
        %v792 = vpop.xlane.xlu0 %791
        %v793 = vcvt.f32.s32 %v792
        %v794 = vcvt.f32.s32 %v788
        %v795 = vshll.u32 %v794, 16
        %v796 = vadd.s32 %v795, %v793
        %v797 = vand.u32 %v505, 65535
        %v798 = vshra.s32 %v505, 16
        %v799 = vcvt.s32.f32 %v797
        %v800 = vcvt.s32.f32 %v798
        %801 = vmin.xlane.f32.xlu0 %v800
        %v802 = vpop.xlane.xlu0 %801
        %vm803 = vcmp.eq.f32.partialorder %v800, %v802
        %v804 = vsel %vm803, %v799, inf
        %805 = vmin.xlane.f32.xlu0 %v804
        %v806 = vpop.xlane.xlu0 %805
        %v807 = vcvt.f32.s32 %v806
        %v808 = vcvt.f32.s32 %v802
        %v809 = vshll.u32 %v808, 16
        %v810 = vadd.s32 %v809, %v807
        %v811 = vand.u32 %v506, 65535
        %v812 = vshra.s32 %v506, 16
        %v813 = vcvt.s32.f32 %v811
        %v814 = vcvt.s32.f32 %v812
        %815 = vmin.xlane.f32.xlu0 %v814
        %v816 = vpop.xlane.xlu0 %815
        %vm817 = vcmp.eq.f32.partialorder %v814, %v816
        %v818 = vsel %vm817, %v813, inf
        %819 = vmin.xlane.f32.xlu0 %v818
        %v820 = vpop.xlane.xlu0 %819
        %v821 = vcvt.f32.s32 %v820
        %v822 = vcvt.f32.s32 %v816
        %v823 = vshll.u32 %v822, 16
        %v824 = vadd.s32 %v823, %v821
        %v825 = vand.u32 %v507, 65535
        %v826 = vshra.s32 %v507, 16
        %v827 = vcvt.s32.f32 %v825
        %v828 = vcvt.s32.f32 %v826
        %829 = vmin.xlane.f32.xlu0 %v828
        %v830 = vpop.xlane.xlu0 %829
        %vm831 = vcmp.eq.f32.partialorder %v828, %v830
        %v832 = vsel %vm831, %v827, inf
        %833 = vmin.xlane.f32.xlu0 %v832
        %v834 = vpop.xlane.xlu0 %833
        %v835 = vcvt.f32.s32 %v834
        %v836 = vcvt.f32.s32 %v830
        %v837 = vshll.u32 %v836, 16
        %v838 = vadd.s32 %v837, %v835
        %v839 = vand.u32 %v508, 65535
        %v840 = vshra.s32 %v508, 16
        %v841 = vcvt.s32.f32 %v839
        %v842 = vcvt.s32.f32 %v840
        %843 = vmin.xlane.f32.xlu0 %v842
        %v844 = vpop.xlane.xlu0 %843
        %vm845 = vcmp.eq.f32.partialorder %v842, %v844
        %v846 = vsel %vm845, %v841, inf
        %847 = vmin.xlane.f32.xlu0 %v846
        %v848 = vpop.xlane.xlu0 %847
        %v849 = vcvt.f32.s32 %v848
        %v850 = vcvt.f32.s32 %v844
        %v851 = vshll.u32 %v850, 16
        %v852 = vadd.s32 %v851, %v849
        %v853 = vand.u32 %v509, 65535
        %v854 = vshra.s32 %v509, 16
        %v855 = vcvt.s32.f32 %v853
        %v856 = vcvt.s32.f32 %v854
        %857 = vmin.xlane.f32.xlu0 %v856
        %v858 = vpop.xlane.xlu0 %857
        %vm859 = vcmp.eq.f32.partialorder %v856, %v858
        %v860 = vsel %vm859, %v855, inf
        %861 = vmin.xlane.f32.xlu0 %v860
        %v862 = vpop.xlane.xlu0 %861
        %v863 = vcvt.f32.s32 %v862
        %v864 = vcvt.f32.s32 %v858
        %v865 = vshll.u32 %v864, 16
        %v866 = vadd.s32 %v865, %v863
        %v867 = vand.u32 %v510, 65535
        %v868 = vshra.s32 %v510, 16
        %v869 = vcvt.s32.f32 %v867
        %v870 = vcvt.s32.f32 %v868
        %871 = vmin.xlane.f32.xlu0 %v870
        %v872 = vpop.xlane.xlu0 %871
        %vm873 = vcmp.eq.f32.partialorder %v870, %v872
        %v874 = vsel %vm873, %v869, inf
        %875 = vmin.xlane.f32.xlu0 %v874
        %v876 = vpop.xlane.xlu0 %875
        %v877 = vcvt.f32.s32 %v876
        %v878 = vcvt.f32.s32 %v872
        %v879 = vshll.u32 %v878, 16
        %v880 = vadd.s32 %v879, %v877
        %v881 = vand.u32 %v511, 65535
        %v882 = vshra.s32 %v511, 16
        %v883 = vcvt.s32.f32 %v881
        %v884 = vcvt.s32.f32 %v882
        %885 = vmin.xlane.f32.xlu0 %v884
        %v886 = vpop.xlane.xlu0 %885
        %vm887 = vcmp.eq.f32.partialorder %v884, %v886
        %v888 = vsel %vm887, %v883, inf
        %889 = vmin.xlane.f32.xlu0 %v888
        %v890 = vpop.xlane.xlu0 %889
        %v891 = vcvt.f32.s32 %v890
        %v892 = vcvt.f32.s32 %v886
        %v893 = vshll.u32 %v892, 16
        %v894 = vadd.s32 %v893, %v891
        %v895 = vand.u32 %v512, 65535
        %v896 = vshra.s32 %v512, 16
        %v897 = vcvt.s32.f32 %v895
        %v898 = vcvt.s32.f32 %v896
        %899 = vmin.xlane.f32.xlu0 %v898
        %v900 = vpop.xlane.xlu0 %899
        %vm901 = vcmp.eq.f32.partialorder %v898, %v900
        %v902 = vsel %vm901, %v897, inf
        %903 = vmin.xlane.f32.xlu0 %v902
        %v904 = vpop.xlane.xlu0 %903
        %v905 = vcvt.f32.s32 %v904
        %v906 = vcvt.f32.s32 %v900
        %v907 = vshll.u32 %v906, 16
        %v908 = vadd.s32 %v907, %v905
        %v909 = vand.u32 %v513, 65535
        %v910 = vshra.s32 %v513, 16
        %v911 = vcvt.s32.f32 %v909
        %v912 = vcvt.s32.f32 %v910
        %913 = vmin.xlane.f32.xlu0 %v912
        %v914 = vpop.xlane.xlu0 %913
        %vm915 = vcmp.eq.f32.partialorder %v912, %v914
        %v916 = vsel %vm915, %v911, inf
        %917 = vmin.xlane.f32.xlu0 %v916
        %v918 = vpop.xlane.xlu0 %917
        %v919 = vcvt.f32.s32 %v918
        %v920 = vcvt.f32.s32 %v914
        %v921 = vshll.u32 %v920, 16
        %v922 = vadd.s32 %v921, %v919
        %v923 = vand.u32 %v514, 65535
        %v924 = vshra.s32 %v514, 16
        %v925 = vcvt.s32.f32 %v923
        %v926 = vcvt.s32.f32 %v924
        %927 = vmin.xlane.f32.xlu0 %v926
        %v928 = vpop.xlane.xlu0 %927
        %vm929 = vcmp.eq.f32.partialorder %v926, %v928
        %v930 = vsel %vm929, %v925, inf
        %931 = vmin.xlane.f32.xlu0 %v930
        %v932 = vpop.xlane.xlu0 %931
        %v933 = vcvt.f32.s32 %v932
        %v934 = vcvt.f32.s32 %v928
        %v935 = vshll.u32 %v934, 16
        %v936 = vadd.s32 %v935, %v933
        %v937 = vand.u32 %v515, 65535
        %v938 = vshra.s32 %v515, 16
        %v939 = vcvt.s32.f32 %v937
        %v940 = vcvt.s32.f32 %v938
        %941 = vmin.xlane.f32.xlu0 %v940
        %v942 = vpop.xlane.xlu0 %941
        %vm943 = vcmp.eq.f32.partialorder %v940, %v942
        %v944 = vsel %vm943, %v939, inf
        %945 = vmin.xlane.f32.xlu0 %v944
        %v946 = vpop.xlane.xlu0 %945
        %v947 = vcvt.f32.s32 %v946
        %v948 = vcvt.f32.s32 %v942
        %v949 = vshll.u32 %v948, 16
        %v950 = vadd.s32 %v949, %v947
        %v951 = vand.u32 %v516, 65535
        %v952 = vshra.s32 %v516, 16
        %v953 = vcvt.s32.f32 %v951
        %v954 = vcvt.s32.f32 %v952
        %955 = vmin.xlane.f32.xlu0 %v954
        %v956 = vpop.xlane.xlu0 %955
        %vm957 = vcmp.eq.f32.partialorder %v954, %v956
        %v958 = vsel %vm957, %v953, inf
        %959 = vmin.xlane.f32.xlu0 %v958
        %v960 = vpop.xlane.xlu0 %959
        %v961 = vcvt.f32.s32 %v960
        %v962 = vcvt.f32.s32 %v956
        %v963 = vshll.u32 %v962, 16
        %v964 = vadd.s32 %v963, %v961
        %vm965 = vcmp.eq.s32.totalorder %v388, %v530
        %vm966 = vcmp.eq.s32.totalorder %v388, %v544
        %vm967 = vcmp.eq.s32.totalorder %v388, %v558
        %vm968 = vcmp.eq.s32.totalorder %v388, %v572
        %vm969 = vcmp.eq.s32.totalorder %v388, %v586
        %vm970 = vcmp.eq.s32.totalorder %v388, %v600
        %vm971 = vcmp.eq.s32.totalorder %v388, %v614
        %vm972 = vcmp.eq.s32.totalorder %v388, %v628
        %vm973 = vcmp.eq.s32.totalorder %v388, %v642
        %vm974 = vcmp.eq.s32.totalorder %v388, %v656
        %vm975 = vcmp.eq.s32.totalorder %v388, %v670
        %vm976 = vcmp.eq.s32.totalorder %v388, %v684
        %vm977 = vcmp.eq.s32.totalorder %v388, %v698
        %vm978 = vcmp.eq.s32.totalorder %v388, %v712
        %vm979 = vcmp.eq.s32.totalorder %v388, %v726
        %vm980 = vcmp.eq.s32.totalorder %v388, %v740
        %vm981 = vcmp.eq.s32.totalorder %v388, %v754
        %vm982 = vcmp.eq.s32.totalorder %v388, %v768
        %vm983 = vcmp.eq.s32.totalorder %v388, %v782
        %vm984 = vcmp.eq.s32.totalorder %v388, %v796
        %vm985 = vcmp.eq.s32.totalorder %v388, %v810
        %vm986 = vcmp.eq.s32.totalorder %v388, %v824
        %vm987 = vcmp.eq.s32.totalorder %v388, %v838
        %vm988 = vcmp.eq.s32.totalorder %v388, %v852
        %vm989 = vcmp.eq.s32.totalorder %v388, %v866
        %vm990 = vcmp.eq.s32.totalorder %v388, %v880
        %vm991 = vcmp.eq.s32.totalorder %v388, %v894
        %vm992 = vcmp.eq.s32.totalorder %v388, %v908
        %vm993 = vcmp.eq.s32.totalorder %v388, %v922
        %vm994 = vcmp.eq.s32.totalorder %v388, %v936
        %vm995 = vcmp.eq.s32.totalorder %v388, %v950
        %vm996 = vcmp.eq.s32.totalorder %v388, %v964
        %v997 = vsel %vm965, 1, 0
        %v998 = vsel %vm966, 1, 0
        %v999 = vsel %vm967, 1, 0
        %v1000 = vsel %vm968, 1, 0
        %v1001 = vsel %vm969, 1, 0
        %v1002 = vsel %vm970, 1, 0
        %v1003 = vsel %vm971, 1, 0
        %v1004 = vsel %vm972, 1, 0
        %v1005 = vsel %vm973, 1, 0
        %v1006 = vsel %vm974, 1, 0
        %v1007 = vsel %vm975, 1, 0
        %v1008 = vsel %vm976, 1, 0
        %v1009 = vsel %vm977, 1, 0
        %v1010 = vsel %vm978, 1, 0
        %v1011 = vsel %vm979, 1, 0
        %v1012 = vsel %vm980, 1, 0
        %v1013 = vsel %vm981, 1, 0
        %v1014 = vsel %vm982, 1, 0
        %v1015 = vsel %vm983, 1, 0
        %v1016 = vsel %vm984, 1, 0
        %v1017 = vsel %vm985, 1, 0
        %v1018 = vsel %vm986, 1, 0
        %v1019 = vsel %vm987, 1, 0
        %v1020 = vsel %vm988, 1, 0
        %v1021 = vsel %vm989, 1, 0
        %v1022 = vsel %vm990, 1, 0
        %v1023 = vsel %vm991, 1, 0
        %v1024 = vsel %vm992, 1, 0
        %v1025 = vsel %vm993, 1, 0
        %v1026 = vsel %vm994, 1, 0
        %v1027 = vsel %vm995, 1, 0
        %v1028 = vsel %vm996, 1, 0
        %v1029 = vcvt.s32.f32 %v997
        %v1030 = vcvt.s32.f32 %v998
        %v1031 = vcvt.s32.f32 %v999
        %v1032 = vcvt.s32.f32 %v1000
        %v1033 = vcvt.s32.f32 %v1001
        %v1034 = vcvt.s32.f32 %v1002
        %v1035 = vcvt.s32.f32 %v1003
        %v1036 = vcvt.s32.f32 %v1004
        %v1037 = vcvt.s32.f32 %v1005
        %v1038 = vcvt.s32.f32 %v1006
        %v1039 = vcvt.s32.f32 %v1007
        %v1040 = vcvt.s32.f32 %v1008
        %v1041 = vcvt.s32.f32 %v1009
        %v1042 = vcvt.s32.f32 %v1010
        %v1043 = vcvt.s32.f32 %v1011
        %v1044 = vcvt.s32.f32 %v1012
        %v1045 = vcvt.s32.f32 %v1013
        %v1046 = vcvt.s32.f32 %v1014
        %v1047 = vcvt.s32.f32 %v1015
        %v1048 = vcvt.s32.f32 %v1016
        %v1049 = vcvt.s32.f32 %v1017
        %v1050 = vcvt.s32.f32 %v1018
        %v1051 = vcvt.s32.f32 %v1019
        %v1052 = vcvt.s32.f32 %v1020
        %v1053 = vcvt.s32.f32 %v1021
        %v1054 = vcvt.s32.f32 %v1022
        %v1055 = vcvt.s32.f32 %v1023
        %v1056 = vcvt.s32.f32 %v1024
        %v1057 = vcvt.s32.f32 %v1025
        %v1058 = vcvt.s32.f32 %v1026
        %v1059 = vcvt.s32.f32 %v1027
        %v1060 = vcvt.s32.f32 %v1028
        %v1061 = vadd.f32 %v1029, 0.0
        %v1062 = vadd.f32 %v1030, 0.0
        %v1063 = vadd.f32 %v1031, 0.0
        %v1064 = vadd.f32 %v1032, 0.0
        %v1065 = vadd.f32 %v1033, 0.0
        %v1066 = vadd.f32 %v1034, 0.0
        %v1067 = vadd.f32 %v1035, 0.0
        %v1068 = vadd.f32 %v1036, 0.0
        %v1069 = vadd.f32 %v1037, 0.0
        %v1070 = vadd.f32 %v1038, 0.0
        %v1071 = vadd.f32 %v1039, 0.0
        %v1072 = vadd.f32 %v1040, 0.0
        %v1073 = vadd.f32 %v1041, 0.0
        %v1074 = vadd.f32 %v1042, 0.0
        %v1075 = vadd.f32 %v1043, 0.0
        %v1076 = vadd.f32 %v1044, 0.0
        %v1077 = vadd.f32 %v1045, 0.0
        %v1078 = vadd.f32 %v1046, 0.0
        %v1079 = vadd.f32 %v1047, 0.0
        %v1080 = vadd.f32 %v1048, 0.0
        %v1081 = vadd.f32 %v1049, 0.0
        %v1082 = vadd.f32 %v1050, 0.0
        %v1083 = vadd.f32 %v1051, 0.0
        %v1084 = vadd.f32 %v1052, 0.0
        %v1085 = vadd.f32 %v1053, 0.0
        %v1086 = vadd.f32 %v1054, 0.0
        %v1087 = vadd.f32 %v1055, 0.0
        %v1088 = vadd.f32 %v1056, 0.0
        %v1089 = vadd.f32 %v1057, 0.0
        %v1090 = vadd.f32 %v1058, 0.0
        %v1091 = vadd.f32 %v1059, 0.0
        %v1092 = vadd.f32 %v1060, 0.0
        %v1093 = vsel %vm965, inf, %v292
        %v1094 = vsel %vm966, inf, %v295
        %v1095 = vsel %vm967, inf, %v298
        %v1096 = vsel %vm968, inf, %v301
        %v1097 = vsel %vm969, inf, %v304
        %v1098 = vsel %vm970, inf, %v307
        %v1099 = vsel %vm971, inf, %v310
        %v1100 = vsel %vm972, inf, %v313
        %v1101 = vsel %vm973, inf, %v316
        %v1102 = vsel %vm974, inf, %v319
        %v1103 = vsel %vm975, inf, %v322
        %v1104 = vsel %vm976, inf, %v325
        %v1105 = vsel %vm977, inf, %v328
        %v1106 = vsel %vm978, inf, %v331
        %v1107 = vsel %vm979, inf, %v334
        %v1108 = vsel %vm980, inf, %v337
        %v1109 = vsel %vm981, inf, %v340
        %v1110 = vsel %vm982, inf, %v343
        %v1111 = vsel %vm983, inf, %v346
        %v1112 = vsel %vm984, inf, %v349
        %v1113 = vsel %vm985, inf, %v352
        %v1114 = vsel %vm986, inf, %v355
        %v1115 = vsel %vm987, inf, %v358
        %v1116 = vsel %vm988, inf, %v361
        %v1117 = vsel %vm989, inf, %v364
        %v1118 = vsel %vm990, inf, %v367
        %v1119 = vsel %vm991, inf, %v370
        %v1120 = vsel %vm992, inf, %v373
        %v1121 = vsel %vm993, inf, %v376
        %v1122 = vsel %vm994, inf, %v379
        %v1123 = vsel %vm995, inf, %v382
        %v1124 = vsel %vm996, inf, %v385
        %1125 = vmin.xlane.f32.xlu0 %v1093
        %v1126 = vpop.xlane.xlu0 %1125
        %1127 = vmin.xlane.f32.xlu0 %v1094
        %v1128 = vpop.xlane.xlu0 %1127
        %1129 = vmin.xlane.f32.xlu0 %v1095
        %v1130 = vpop.xlane.xlu0 %1129
        %1131 = vmin.xlane.f32.xlu0 %v1096
        %v1132 = vpop.xlane.xlu0 %1131
        %1133 = vmin.xlane.f32.xlu0 %v1097
        %v1134 = vpop.xlane.xlu0 %1133
        %1135 = vmin.xlane.f32.xlu0 %v1098
        %v1136 = vpop.xlane.xlu0 %1135
        %1137 = vmin.xlane.f32.xlu0 %v1099
        %v1138 = vpop.xlane.xlu0 %1137
        %1139 = vmin.xlane.f32.xlu0 %v1100
        %v1140 = vpop.xlane.xlu0 %1139
        %1141 = vmin.xlane.f32.xlu0 %v1101
        %v1142 = vpop.xlane.xlu0 %1141
        %1143 = vmin.xlane.f32.xlu0 %v1102
        %v1144 = vpop.xlane.xlu0 %1143
        %1145 = vmin.xlane.f32.xlu0 %v1103
        %v1146 = vpop.xlane.xlu0 %1145
        %1147 = vmin.xlane.f32.xlu0 %v1104
        %v1148 = vpop.xlane.xlu0 %1147
        %1149 = vmin.xlane.f32.xlu0 %v1105
        %v1150 = vpop.xlane.xlu0 %1149
        %1151 = vmin.xlane.f32.xlu0 %v1106
        %v1152 = vpop.xlane.xlu0 %1151
        %1153 = vmin.xlane.f32.xlu0 %v1107
        %v1154 = vpop.xlane.xlu0 %1153
        %1155 = vmin.xlane.f32.xlu0 %v1108
        %v1156 = vpop.xlane.xlu0 %1155
        %1157 = vmin.xlane.f32.xlu0 %v1109
        %v1158 = vpop.xlane.xlu0 %1157
        %1159 = vmin.xlane.f32.xlu0 %v1110
        %v1160 = vpop.xlane.xlu0 %1159
        %1161 = vmin.xlane.f32.xlu0 %v1111
        %v1162 = vpop.xlane.xlu0 %1161
        %1163 = vmin.xlane.f32.xlu0 %v1112
        %v1164 = vpop.xlane.xlu0 %1163
        %1165 = vmin.xlane.f32.xlu0 %v1113
        %v1166 = vpop.xlane.xlu0 %1165
        %1167 = vmin.xlane.f32.xlu0 %v1114
        %v1168 = vpop.xlane.xlu0 %1167
        %1169 = vmin.xlane.f32.xlu0 %v1115
        %v1170 = vpop.xlane.xlu0 %1169
        %1171 = vmin.xlane.f32.xlu0 %v1116
        %v1172 = vpop.xlane.xlu0 %1171
        %1173 = vmin.xlane.f32.xlu0 %v1117
        %v1174 = vpop.xlane.xlu0 %1173
        %1175 = vmin.xlane.f32.xlu0 %v1118
        %v1176 = vpop.xlane.xlu0 %1175
        %1177 = vmin.xlane.f32.xlu0 %v1119
        %v1178 = vpop.xlane.xlu0 %1177
        %1179 = vmin.xlane.f32.xlu0 %v1120
        %v1180 = vpop.xlane.xlu0 %1179
        %1181 = vmin.xlane.f32.xlu0 %v1121
        %v1182 = vpop.xlane.xlu0 %1181
        %1183 = vmin.xlane.f32.xlu0 %v1122
        %v1184 = vpop.xlane.xlu0 %1183
        %1185 = vmin.xlane.f32.xlu0 %v1123
        %v1186 = vpop.xlane.xlu0 %1185
        %1187 = vmin.xlane.f32.xlu0 %v1124
        %v1188 = vpop.xlane.xlu0 %1187
        %vm1189 = vcmp.eq.f32.partialorder %v1093, %v1126
        %vm1190 = vcmp.eq.f32.partialorder %v1094, %v1128
        %vm1191 = vcmp.eq.f32.partialorder %v1095, %v1130
        %vm1192 = vcmp.eq.f32.partialorder %v1096, %v1132
        %vm1193 = vcmp.eq.f32.partialorder %v1097, %v1134
        %vm1194 = vcmp.eq.f32.partialorder %v1098, %v1136
        %vm1195 = vcmp.eq.f32.partialorder %v1099, %v1138
        %vm1196 = vcmp.eq.f32.partialorder %v1100, %v1140
        %vm1197 = vcmp.eq.f32.partialorder %v1101, %v1142
        %vm1198 = vcmp.eq.f32.partialorder %v1102, %v1144
        %vm1199 = vcmp.eq.f32.partialorder %v1103, %v1146
        %vm1200 = vcmp.eq.f32.partialorder %v1104, %v1148
        %vm1201 = vcmp.eq.f32.partialorder %v1105, %v1150
        %vm1202 = vcmp.eq.f32.partialorder %v1106, %v1152
        %vm1203 = vcmp.eq.f32.partialorder %v1107, %v1154
        %vm1204 = vcmp.eq.f32.partialorder %v1108, %v1156
        %vm1205 = vcmp.eq.f32.partialorder %v1109, %v1158
        %vm1206 = vcmp.eq.f32.partialorder %v1110, %v1160
        %vm1207 = vcmp.eq.f32.partialorder %v1111, %v1162
        %vm1208 = vcmp.eq.f32.partialorder %v1112, %v1164
        %vm1209 = vcmp.eq.f32.partialorder %v1113, %v1166
        %vm1210 = vcmp.eq.f32.partialorder %v1114, %v1168
        %vm1211 = vcmp.eq.f32.partialorder %v1115, %v1170
        %vm1212 = vcmp.eq.f32.partialorder %v1116, %v1172
        %vm1213 = vcmp.eq.f32.partialorder %v1117, %v1174
        %vm1214 = vcmp.eq.f32.partialorder %v1118, %v1176
        %vm1215 = vcmp.eq.f32.partialorder %v1119, %v1178
        %vm1216 = vcmp.eq.f32.partialorder %v1120, %v1180
        %vm1217 = vcmp.eq.f32.partialorder %v1121, %v1182
        %vm1218 = vcmp.eq.f32.partialorder %v1122, %v1184
        %vm1219 = vcmp.eq.f32.partialorder %v1123, %v1186
        %vm1220 = vcmp.eq.f32.partialorder %v1124, %v1188
        %v1221 = vsel %vm1189, %v388, 128
        %v1222 = vsel %vm1190, %v388, 128
        %v1223 = vsel %vm1191, %v388, 128
        %v1224 = vsel %vm1192, %v388, 128
        %v1225 = vsel %vm1193, %v388, 128
        %v1226 = vsel %vm1194, %v388, 128
        %v1227 = vsel %vm1195, %v388, 128
        %v1228 = vsel %vm1196, %v388, 128
        %v1229 = vsel %vm1197, %v388, 128
        %v1230 = vsel %vm1198, %v388, 128
        %v1231 = vsel %vm1199, %v388, 128
        %v1232 = vsel %vm1200, %v388, 128
        %v1233 = vsel %vm1201, %v388, 128
        %v1234 = vsel %vm1202, %v388, 128
        %v1235 = vsel %vm1203, %v388, 128
        %v1236 = vsel %vm1204, %v388, 128
        %v1237 = vsel %vm1205, %v388, 128
        %v1238 = vsel %vm1206, %v388, 128
        %v1239 = vsel %vm1207, %v388, 128
        %v1240 = vsel %vm1208, %v388, 128
        %v1241 = vsel %vm1209, %v388, 128
        %v1242 = vsel %vm1210, %v388, 128
        %v1243 = vsel %vm1211, %v388, 128
        %v1244 = vsel %vm1212, %v388, 128
        %v1245 = vsel %vm1213, %v388, 128
        %v1246 = vsel %vm1214, %v388, 128
        %v1247 = vsel %vm1215, %v388, 128
        %v1248 = vsel %vm1216, %v388, 128
        %v1249 = vsel %vm1217, %v388, 128
        %v1250 = vsel %vm1218, %v388, 128
        %v1251 = vsel %vm1219, %v388, 128
        %v1252 = vsel %vm1220, %v388, 128
        %v1253 = vand.u32 %v1221, 65535
        %v1254 = vshra.s32 %v1221, 16
        %v1255 = vcvt.s32.f32 %v1253
        %v1256 = vcvt.s32.f32 %v1254
        %1257 = vmin.xlane.f32.xlu0 %v1256
        %v1258 = vpop.xlane.xlu0 %1257
        %vm1259 = vcmp.eq.f32.partialorder %v1256, %v1258
        %v1260 = vsel %vm1259, %v1255, inf
        %1261 = vmin.xlane.f32.xlu0 %v1260
        %v1262 = vpop.xlane.xlu0 %1261
        %v1263 = vcvt.f32.s32 %v1262
        %v1264 = vcvt.f32.s32 %v1258
        %v1265 = vshll.u32 %v1264, 16
        %v1266 = vadd.s32 %v1265, %v1263
        %v1267 = vand.u32 %v1222, 65535
        %v1268 = vshra.s32 %v1222, 16
        %v1269 = vcvt.s32.f32 %v1267
        %v1270 = vcvt.s32.f32 %v1268
        %1271 = vmin.xlane.f32.xlu0 %v1270
        %v1272 = vpop.xlane.xlu0 %1271
        %vm1273 = vcmp.eq.f32.partialorder %v1270, %v1272
        %v1274 = vsel %vm1273, %v1269, inf
        %1275 = vmin.xlane.f32.xlu0 %v1274
        %v1276 = vpop.xlane.xlu0 %1275
        %v1277 = vcvt.f32.s32 %v1276
        %v1278 = vcvt.f32.s32 %v1272
        %v1279 = vshll.u32 %v1278, 16
        %v1280 = vadd.s32 %v1279, %v1277
        %v1281 = vand.u32 %v1223, 65535
        %v1282 = vshra.s32 %v1223, 16
        %v1283 = vcvt.s32.f32 %v1281
        %v1284 = vcvt.s32.f32 %v1282
        %1285 = vmin.xlane.f32.xlu0 %v1284
        %v1286 = vpop.xlane.xlu0 %1285
        %vm1287 = vcmp.eq.f32.partialorder %v1284, %v1286
        %v1288 = vsel %vm1287, %v1283, inf
        %1289 = vmin.xlane.f32.xlu0 %v1288
        %v1290 = vpop.xlane.xlu0 %1289
        %v1291 = vcvt.f32.s32 %v1290
        %v1292 = vcvt.f32.s32 %v1286
        %v1293 = vshll.u32 %v1292, 16
        %v1294 = vadd.s32 %v1293, %v1291
        %v1295 = vand.u32 %v1224, 65535
        %v1296 = vshra.s32 %v1224, 16
        %v1297 = vcvt.s32.f32 %v1295
        %v1298 = vcvt.s32.f32 %v1296
        %1299 = vmin.xlane.f32.xlu0 %v1298
        %v1300 = vpop.xlane.xlu0 %1299
        %vm1301 = vcmp.eq.f32.partialorder %v1298, %v1300
        %v1302 = vsel %vm1301, %v1297, inf
        %1303 = vmin.xlane.f32.xlu0 %v1302
        %v1304 = vpop.xlane.xlu0 %1303
        %v1305 = vcvt.f32.s32 %v1304
        %v1306 = vcvt.f32.s32 %v1300
        %v1307 = vshll.u32 %v1306, 16
        %v1308 = vadd.s32 %v1307, %v1305
        %v1309 = vand.u32 %v1225, 65535
        %v1310 = vshra.s32 %v1225, 16
        %v1311 = vcvt.s32.f32 %v1309
        %v1312 = vcvt.s32.f32 %v1310
        %1313 = vmin.xlane.f32.xlu0 %v1312
        %v1314 = vpop.xlane.xlu0 %1313
        %vm1315 = vcmp.eq.f32.partialorder %v1312, %v1314
        %v1316 = vsel %vm1315, %v1311, inf
        %1317 = vmin.xlane.f32.xlu0 %v1316
        %v1318 = vpop.xlane.xlu0 %1317
        %v1319 = vcvt.f32.s32 %v1318
        %v1320 = vcvt.f32.s32 %v1314
        %v1321 = vshll.u32 %v1320, 16
        %v1322 = vadd.s32 %v1321, %v1319
        %v1323 = vand.u32 %v1226, 65535
        %v1324 = vshra.s32 %v1226, 16
        %v1325 = vcvt.s32.f32 %v1323
        %v1326 = vcvt.s32.f32 %v1324
        %1327 = vmin.xlane.f32.xlu0 %v1326
        %v1328 = vpop.xlane.xlu0 %1327
        %vm1329 = vcmp.eq.f32.partialorder %v1326, %v1328
        %v1330 = vsel %vm1329, %v1325, inf
        %1331 = vmin.xlane.f32.xlu0 %v1330
        %v1332 = vpop.xlane.xlu0 %1331
        %v1333 = vcvt.f32.s32 %v1332
        %v1334 = vcvt.f32.s32 %v1328
        %v1335 = vshll.u32 %v1334, 16
        %v1336 = vadd.s32 %v1335, %v1333
        %v1337 = vand.u32 %v1227, 65535
        %v1338 = vshra.s32 %v1227, 16
        %v1339 = vcvt.s32.f32 %v1337
        %v1340 = vcvt.s32.f32 %v1338
        %1341 = vmin.xlane.f32.xlu0 %v1340
        %v1342 = vpop.xlane.xlu0 %1341
        %vm1343 = vcmp.eq.f32.partialorder %v1340, %v1342
        %v1344 = vsel %vm1343, %v1339, inf
        %1345 = vmin.xlane.f32.xlu0 %v1344
        %v1346 = vpop.xlane.xlu0 %1345
        %v1347 = vcvt.f32.s32 %v1346
        %v1348 = vcvt.f32.s32 %v1342
        %v1349 = vshll.u32 %v1348, 16
        %v1350 = vadd.s32 %v1349, %v1347
        %v1351 = vand.u32 %v1228, 65535
        %v1352 = vshra.s32 %v1228, 16
        %v1353 = vcvt.s32.f32 %v1351
        %v1354 = vcvt.s32.f32 %v1352
        %1355 = vmin.xlane.f32.xlu0 %v1354
        %v1356 = vpop.xlane.xlu0 %1355
        %vm1357 = vcmp.eq.f32.partialorder %v1354, %v1356
        %v1358 = vsel %vm1357, %v1353, inf
        %1359 = vmin.xlane.f32.xlu0 %v1358
        %v1360 = vpop.xlane.xlu0 %1359
        %v1361 = vcvt.f32.s32 %v1360
        %v1362 = vcvt.f32.s32 %v1356
        %v1363 = vshll.u32 %v1362, 16
        %v1364 = vadd.s32 %v1363, %v1361
        %v1365 = vand.u32 %v1229, 65535
        %v1366 = vshra.s32 %v1229, 16
        %v1367 = vcvt.s32.f32 %v1365
        %v1368 = vcvt.s32.f32 %v1366
        %1369 = vmin.xlane.f32.xlu0 %v1368
        %v1370 = vpop.xlane.xlu0 %1369
        %vm1371 = vcmp.eq.f32.partialorder %v1368, %v1370
        %v1372 = vsel %vm1371, %v1367, inf
        %1373 = vmin.xlane.f32.xlu0 %v1372
        %v1374 = vpop.xlane.xlu0 %1373
        %v1375 = vcvt.f32.s32 %v1374
        %v1376 = vcvt.f32.s32 %v1370
        %v1377 = vshll.u32 %v1376, 16
        %v1378 = vadd.s32 %v1377, %v1375
        %v1379 = vand.u32 %v1230, 65535
        %v1380 = vshra.s32 %v1230, 16
        %v1381 = vcvt.s32.f32 %v1379
        %v1382 = vcvt.s32.f32 %v1380
        %1383 = vmin.xlane.f32.xlu0 %v1382
        %v1384 = vpop.xlane.xlu0 %1383
        %vm1385 = vcmp.eq.f32.partialorder %v1382, %v1384
        %v1386 = vsel %vm1385, %v1381, inf
        %1387 = vmin.xlane.f32.xlu0 %v1386
        %v1388 = vpop.xlane.xlu0 %1387
        %v1389 = vcvt.f32.s32 %v1388
        %v1390 = vcvt.f32.s32 %v1384
        %v1391 = vshll.u32 %v1390, 16
        %v1392 = vadd.s32 %v1391, %v1389
        %v1393 = vand.u32 %v1231, 65535
        %v1394 = vshra.s32 %v1231, 16
        %v1395 = vcvt.s32.f32 %v1393
        %v1396 = vcvt.s32.f32 %v1394
        %1397 = vmin.xlane.f32.xlu0 %v1396
        %v1398 = vpop.xlane.xlu0 %1397
        %vm1399 = vcmp.eq.f32.partialorder %v1396, %v1398
        %v1400 = vsel %vm1399, %v1395, inf
        %1401 = vmin.xlane.f32.xlu0 %v1400
        %v1402 = vpop.xlane.xlu0 %1401
        %v1403 = vcvt.f32.s32 %v1402
        %v1404 = vcvt.f32.s32 %v1398
        %v1405 = vshll.u32 %v1404, 16
        %v1406 = vadd.s32 %v1405, %v1403
        %v1407 = vand.u32 %v1232, 65535
        %v1408 = vshra.s32 %v1232, 16
        %v1409 = vcvt.s32.f32 %v1407
        %v1410 = vcvt.s32.f32 %v1408
        %1411 = vmin.xlane.f32.xlu0 %v1410
        %v1412 = vpop.xlane.xlu0 %1411
        %vm1413 = vcmp.eq.f32.partialorder %v1410, %v1412
        %v1414 = vsel %vm1413, %v1409, inf
        %1415 = vmin.xlane.f32.xlu0 %v1414
        %v1416 = vpop.xlane.xlu0 %1415
        %v1417 = vcvt.f32.s32 %v1416
        %v1418 = vcvt.f32.s32 %v1412
        %v1419 = vshll.u32 %v1418, 16
        %v1420 = vadd.s32 %v1419, %v1417
        %v1421 = vand.u32 %v1233, 65535
        %v1422 = vshra.s32 %v1233, 16
        %v1423 = vcvt.s32.f32 %v1421
        %v1424 = vcvt.s32.f32 %v1422
        %1425 = vmin.xlane.f32.xlu0 %v1424
        %v1426 = vpop.xlane.xlu0 %1425
        %vm1427 = vcmp.eq.f32.partialorder %v1424, %v1426
        %v1428 = vsel %vm1427, %v1423, inf
        %1429 = vmin.xlane.f32.xlu0 %v1428
        %v1430 = vpop.xlane.xlu0 %1429
        %v1431 = vcvt.f32.s32 %v1430
        %v1432 = vcvt.f32.s32 %v1426
        %v1433 = vshll.u32 %v1432, 16
        %v1434 = vadd.s32 %v1433, %v1431
        %v1435 = vand.u32 %v1234, 65535
        %v1436 = vshra.s32 %v1234, 16
        %v1437 = vcvt.s32.f32 %v1435
        %v1438 = vcvt.s32.f32 %v1436
        %1439 = vmin.xlane.f32.xlu0 %v1438
        %v1440 = vpop.xlane.xlu0 %1439
        %vm1441 = vcmp.eq.f32.partialorder %v1438, %v1440
        %v1442 = vsel %vm1441, %v1437, inf
        %1443 = vmin.xlane.f32.xlu0 %v1442
        %v1444 = vpop.xlane.xlu0 %1443
        %v1445 = vcvt.f32.s32 %v1444
        %v1446 = vcvt.f32.s32 %v1440
        %v1447 = vshll.u32 %v1446, 16
        %v1448 = vadd.s32 %v1447, %v1445
        %v1449 = vand.u32 %v1235, 65535
        %v1450 = vshra.s32 %v1235, 16
        %v1451 = vcvt.s32.f32 %v1449
        %v1452 = vcvt.s32.f32 %v1450
        %1453 = vmin.xlane.f32.xlu0 %v1452
        %v1454 = vpop.xlane.xlu0 %1453
        %vm1455 = vcmp.eq.f32.partialorder %v1452, %v1454
        %v1456 = vsel %vm1455, %v1451, inf
        %1457 = vmin.xlane.f32.xlu0 %v1456
        %v1458 = vpop.xlane.xlu0 %1457
        %v1459 = vcvt.f32.s32 %v1458
        %v1460 = vcvt.f32.s32 %v1454
        %v1461 = vshll.u32 %v1460, 16
        %v1462 = vadd.s32 %v1461, %v1459
        %v1463 = vand.u32 %v1236, 65535
        %v1464 = vshra.s32 %v1236, 16
        %v1465 = vcvt.s32.f32 %v1463
        %v1466 = vcvt.s32.f32 %v1464
        %1467 = vmin.xlane.f32.xlu0 %v1466
        %v1468 = vpop.xlane.xlu0 %1467
        %vm1469 = vcmp.eq.f32.partialorder %v1466, %v1468
        %v1470 = vsel %vm1469, %v1465, inf
        %1471 = vmin.xlane.f32.xlu0 %v1470
        %v1472 = vpop.xlane.xlu0 %1471
        %v1473 = vcvt.f32.s32 %v1472
        %v1474 = vcvt.f32.s32 %v1468
        %v1475 = vshll.u32 %v1474, 16
        %v1476 = vadd.s32 %v1475, %v1473
        %v1477 = vand.u32 %v1237, 65535
        %v1478 = vshra.s32 %v1237, 16
        %v1479 = vcvt.s32.f32 %v1477
        %v1480 = vcvt.s32.f32 %v1478
        %1481 = vmin.xlane.f32.xlu0 %v1480
        %v1482 = vpop.xlane.xlu0 %1481
        %vm1483 = vcmp.eq.f32.partialorder %v1480, %v1482
        %v1484 = vsel %vm1483, %v1479, inf
        %1485 = vmin.xlane.f32.xlu0 %v1484
        %v1486 = vpop.xlane.xlu0 %1485
        %v1487 = vcvt.f32.s32 %v1486
        %v1488 = vcvt.f32.s32 %v1482
        %v1489 = vshll.u32 %v1488, 16
        %v1490 = vadd.s32 %v1489, %v1487
        %v1491 = vand.u32 %v1238, 65535
        %v1492 = vshra.s32 %v1238, 16
        %v1493 = vcvt.s32.f32 %v1491
        %v1494 = vcvt.s32.f32 %v1492
        %1495 = vmin.xlane.f32.xlu0 %v1494
        %v1496 = vpop.xlane.xlu0 %1495
        %vm1497 = vcmp.eq.f32.partialorder %v1494, %v1496
        %v1498 = vsel %vm1497, %v1493, inf
        %1499 = vmin.xlane.f32.xlu0 %v1498
        %v1500 = vpop.xlane.xlu0 %1499
        %v1501 = vcvt.f32.s32 %v1500
        %v1502 = vcvt.f32.s32 %v1496
        %v1503 = vshll.u32 %v1502, 16
        %v1504 = vadd.s32 %v1503, %v1501
        %v1505 = vand.u32 %v1239, 65535
        %v1506 = vshra.s32 %v1239, 16
        %v1507 = vcvt.s32.f32 %v1505
        %v1508 = vcvt.s32.f32 %v1506
        %1509 = vmin.xlane.f32.xlu0 %v1508
        %v1510 = vpop.xlane.xlu0 %1509
        %vm1511 = vcmp.eq.f32.partialorder %v1508, %v1510
        %v1512 = vsel %vm1511, %v1507, inf
        %1513 = vmin.xlane.f32.xlu0 %v1512
        %v1514 = vpop.xlane.xlu0 %1513
        %v1515 = vcvt.f32.s32 %v1514
        %v1516 = vcvt.f32.s32 %v1510
        %v1517 = vshll.u32 %v1516, 16
        %v1518 = vadd.s32 %v1517, %v1515
        %v1519 = vand.u32 %v1240, 65535
        %v1520 = vshra.s32 %v1240, 16
        %v1521 = vcvt.s32.f32 %v1519
        %v1522 = vcvt.s32.f32 %v1520
        %1523 = vmin.xlane.f32.xlu0 %v1522
        %v1524 = vpop.xlane.xlu0 %1523
        %vm1525 = vcmp.eq.f32.partialorder %v1522, %v1524
        %v1526 = vsel %vm1525, %v1521, inf
        %1527 = vmin.xlane.f32.xlu0 %v1526
        %v1528 = vpop.xlane.xlu0 %1527
        %v1529 = vcvt.f32.s32 %v1528
        %v1530 = vcvt.f32.s32 %v1524
        %v1531 = vshll.u32 %v1530, 16
        %v1532 = vadd.s32 %v1531, %v1529
        %v1533 = vand.u32 %v1241, 65535
        %v1534 = vshra.s32 %v1241, 16
        %v1535 = vcvt.s32.f32 %v1533
        %v1536 = vcvt.s32.f32 %v1534
        %1537 = vmin.xlane.f32.xlu0 %v1536
        %v1538 = vpop.xlane.xlu0 %1537
        %vm1539 = vcmp.eq.f32.partialorder %v1536, %v1538
        %v1540 = vsel %vm1539, %v1535, inf
        %1541 = vmin.xlane.f32.xlu0 %v1540
        %v1542 = vpop.xlane.xlu0 %1541
        %v1543 = vcvt.f32.s32 %v1542
        %v1544 = vcvt.f32.s32 %v1538
        %v1545 = vshll.u32 %v1544, 16
        %v1546 = vadd.s32 %v1545, %v1543
        %v1547 = vand.u32 %v1242, 65535
        %v1548 = vshra.s32 %v1242, 16
        %v1549 = vcvt.s32.f32 %v1547
        %v1550 = vcvt.s32.f32 %v1548
        %1551 = vmin.xlane.f32.xlu0 %v1550
        %v1552 = vpop.xlane.xlu0 %1551
        %vm1553 = vcmp.eq.f32.partialorder %v1550, %v1552
        %v1554 = vsel %vm1553, %v1549, inf
        %1555 = vmin.xlane.f32.xlu0 %v1554
        %v1556 = vpop.xlane.xlu0 %1555
        %v1557 = vcvt.f32.s32 %v1556
        %v1558 = vcvt.f32.s32 %v1552
        %v1559 = vshll.u32 %v1558, 16
        %v1560 = vadd.s32 %v1559, %v1557
        %v1561 = vand.u32 %v1243, 65535
        %v1562 = vshra.s32 %v1243, 16
        %v1563 = vcvt.s32.f32 %v1561
        %v1564 = vcvt.s32.f32 %v1562
        %1565 = vmin.xlane.f32.xlu0 %v1564
        %v1566 = vpop.xlane.xlu0 %1565
        %vm1567 = vcmp.eq.f32.partialorder %v1564, %v1566
        %v1568 = vsel %vm1567, %v1563, inf
        %1569 = vmin.xlane.f32.xlu0 %v1568
        %v1570 = vpop.xlane.xlu0 %1569
        %v1571 = vcvt.f32.s32 %v1570
        %v1572 = vcvt.f32.s32 %v1566
        %v1573 = vshll.u32 %v1572, 16
        %v1574 = vadd.s32 %v1573, %v1571
        %v1575 = vand.u32 %v1244, 65535
        %v1576 = vshra.s32 %v1244, 16
        %v1577 = vcvt.s32.f32 %v1575
        %v1578 = vcvt.s32.f32 %v1576
        %1579 = vmin.xlane.f32.xlu0 %v1578
        %v1580 = vpop.xlane.xlu0 %1579
        %vm1581 = vcmp.eq.f32.partialorder %v1578, %v1580
        %v1582 = vsel %vm1581, %v1577, inf
        %1583 = vmin.xlane.f32.xlu0 %v1582
        %v1584 = vpop.xlane.xlu0 %1583
        %v1585 = vcvt.f32.s32 %v1584
        %v1586 = vcvt.f32.s32 %v1580
        %v1587 = vshll.u32 %v1586, 16
        %v1588 = vadd.s32 %v1587, %v1585
        %v1589 = vand.u32 %v1245, 65535
        %v1590 = vshra.s32 %v1245, 16
        %v1591 = vcvt.s32.f32 %v1589
        %v1592 = vcvt.s32.f32 %v1590
        %1593 = vmin.xlane.f32.xlu0 %v1592
        %v1594 = vpop.xlane.xlu0 %1593
        %vm1595 = vcmp.eq.f32.partialorder %v1592, %v1594
        %v1596 = vsel %vm1595, %v1591, inf
        %1597 = vmin.xlane.f32.xlu0 %v1596
        %v1598 = vpop.xlane.xlu0 %1597
        %v1599 = vcvt.f32.s32 %v1598
        %v1600 = vcvt.f32.s32 %v1594
        %v1601 = vshll.u32 %v1600, 16
        %v1602 = vadd.s32 %v1601, %v1599
        %v1603 = vand.u32 %v1246, 65535
        %v1604 = vshra.s32 %v1246, 16
        %v1605 = vcvt.s32.f32 %v1603
        %v1606 = vcvt.s32.f32 %v1604
        %1607 = vmin.xlane.f32.xlu0 %v1606
        %v1608 = vpop.xlane.xlu0 %1607
        %vm1609 = vcmp.eq.f32.partialorder %v1606, %v1608
        %v1610 = vsel %vm1609, %v1605, inf
        %1611 = vmin.xlane.f32.xlu0 %v1610
        %v1612 = vpop.xlane.xlu0 %1611
        %v1613 = vcvt.f32.s32 %v1612
        %v1614 = vcvt.f32.s32 %v1608
        %v1615 = vshll.u32 %v1614, 16
        %v1616 = vadd.s32 %v1615, %v1613
        %v1617 = vand.u32 %v1247, 65535
        %v1618 = vshra.s32 %v1247, 16
        %v1619 = vcvt.s32.f32 %v1617
        %v1620 = vcvt.s32.f32 %v1618
        %1621 = vmin.xlane.f32.xlu0 %v1620
        %v1622 = vpop.xlane.xlu0 %1621
        %vm1623 = vcmp.eq.f32.partialorder %v1620, %v1622
        %v1624 = vsel %vm1623, %v1619, inf
        %1625 = vmin.xlane.f32.xlu0 %v1624
        %v1626 = vpop.xlane.xlu0 %1625
        %v1627 = vcvt.f32.s32 %v1626
        %v1628 = vcvt.f32.s32 %v1622
        %v1629 = vshll.u32 %v1628, 16
        %v1630 = vadd.s32 %v1629, %v1627
        %v1631 = vand.u32 %v1248, 65535
        %v1632 = vshra.s32 %v1248, 16
        %v1633 = vcvt.s32.f32 %v1631
        %v1634 = vcvt.s32.f32 %v1632
        %1635 = vmin.xlane.f32.xlu0 %v1634
        %v1636 = vpop.xlane.xlu0 %1635
        %vm1637 = vcmp.eq.f32.partialorder %v1634, %v1636
        %v1638 = vsel %vm1637, %v1633, inf
        %1639 = vmin.xlane.f32.xlu0 %v1638
        %v1640 = vpop.xlane.xlu0 %1639
        %v1641 = vcvt.f32.s32 %v1640
        %v1642 = vcvt.f32.s32 %v1636
        %v1643 = vshll.u32 %v1642, 16
        %v1644 = vadd.s32 %v1643, %v1641
        %v1645 = vand.u32 %v1249, 65535
        %v1646 = vshra.s32 %v1249, 16
        %v1647 = vcvt.s32.f32 %v1645
        %v1648 = vcvt.s32.f32 %v1646
        %1649 = vmin.xlane.f32.xlu0 %v1648
        %v1650 = vpop.xlane.xlu0 %1649
        %vm1651 = vcmp.eq.f32.partialorder %v1648, %v1650
        %v1652 = vsel %vm1651, %v1647, inf
        %1653 = vmin.xlane.f32.xlu0 %v1652
        %v1654 = vpop.xlane.xlu0 %1653
        %v1655 = vcvt.f32.s32 %v1654
        %v1656 = vcvt.f32.s32 %v1650
        %v1657 = vshll.u32 %v1656, 16
        %v1658 = vadd.s32 %v1657, %v1655
        %v1659 = vand.u32 %v1250, 65535
        %v1660 = vshra.s32 %v1250, 16
        %v1661 = vcvt.s32.f32 %v1659
        %v1662 = vcvt.s32.f32 %v1660
        %1663 = vmin.xlane.f32.xlu0 %v1662
        %v1664 = vpop.xlane.xlu0 %1663
        %vm1665 = vcmp.eq.f32.partialorder %v1662, %v1664
        %v1666 = vsel %vm1665, %v1661, inf
        %1667 = vmin.xlane.f32.xlu0 %v1666
        %v1668 = vpop.xlane.xlu0 %1667
        %v1669 = vcvt.f32.s32 %v1668
        %v1670 = vcvt.f32.s32 %v1664
        %v1671 = vshll.u32 %v1670, 16
        %v1672 = vadd.s32 %v1671, %v1669
        %v1673 = vand.u32 %v1251, 65535
        %v1674 = vshra.s32 %v1251, 16
        %v1675 = vcvt.s32.f32 %v1673
        %v1676 = vcvt.s32.f32 %v1674
        %1677 = vmin.xlane.f32.xlu0 %v1676
        %v1678 = vpop.xlane.xlu0 %1677
        %vm1679 = vcmp.eq.f32.partialorder %v1676, %v1678
        %v1680 = vsel %vm1679, %v1675, inf
        %1681 = vmin.xlane.f32.xlu0 %v1680
        %v1682 = vpop.xlane.xlu0 %1681
        %v1683 = vcvt.f32.s32 %v1682
        %v1684 = vcvt.f32.s32 %v1678
        %v1685 = vshll.u32 %v1684, 16
        %v1686 = vadd.s32 %v1685, %v1683
        %v1687 = vand.u32 %v1252, 65535
        %v1688 = vshra.s32 %v1252, 16
        %v1689 = vcvt.s32.f32 %v1687
        %v1690 = vcvt.s32.f32 %v1688
        %1691 = vmin.xlane.f32.xlu0 %v1690
        %v1692 = vpop.xlane.xlu0 %1691
        %vm1693 = vcmp.eq.f32.partialorder %v1690, %v1692
        %v1694 = vsel %vm1693, %v1689, inf
        %1695 = vmin.xlane.f32.xlu0 %v1694
        %v1696 = vpop.xlane.xlu0 %1695
        %v1697 = vcvt.f32.s32 %v1696
        %v1698 = vcvt.f32.s32 %v1692
        %v1699 = vshll.u32 %v1698, 16
        %v1700 = vadd.s32 %v1699, %v1697
        %vm1701 = vcmp.eq.s32.totalorder %v388, %v1266
        %vm1702 = vcmp.eq.s32.totalorder %v388, %v1280
        %vm1703 = vcmp.eq.s32.totalorder %v388, %v1294
        %vm1704 = vcmp.eq.s32.totalorder %v388, %v1308
        %vm1705 = vcmp.eq.s32.totalorder %v388, %v1322
        %vm1706 = vcmp.eq.s32.totalorder %v388, %v1336
        %vm1707 = vcmp.eq.s32.totalorder %v388, %v1350
        %vm1708 = vcmp.eq.s32.totalorder %v388, %v1364
        %vm1709 = vcmp.eq.s32.totalorder %v388, %v1378
        %vm1710 = vcmp.eq.s32.totalorder %v388, %v1392
        %vm1711 = vcmp.eq.s32.totalorder %v388, %v1406
        %vm1712 = vcmp.eq.s32.totalorder %v388, %v1420
        %vm1713 = vcmp.eq.s32.totalorder %v388, %v1434
        %vm1714 = vcmp.eq.s32.totalorder %v388, %v1448
        %vm1715 = vcmp.eq.s32.totalorder %v388, %v1462
        %vm1716 = vcmp.eq.s32.totalorder %v388, %v1476
        %vm1717 = vcmp.eq.s32.totalorder %v388, %v1490
        %vm1718 = vcmp.eq.s32.totalorder %v388, %v1504
        %vm1719 = vcmp.eq.s32.totalorder %v388, %v1518
        %vm1720 = vcmp.eq.s32.totalorder %v388, %v1532
        %vm1721 = vcmp.eq.s32.totalorder %v388, %v1546
        %vm1722 = vcmp.eq.s32.totalorder %v388, %v1560
        %vm1723 = vcmp.eq.s32.totalorder %v388, %v1574
        %vm1724 = vcmp.eq.s32.totalorder %v388, %v1588
        %vm1725 = vcmp.eq.s32.totalorder %v388, %v1602
        %vm1726 = vcmp.eq.s32.totalorder %v388, %v1616
        %vm1727 = vcmp.eq.s32.totalorder %v388, %v1630
        %vm1728 = vcmp.eq.s32.totalorder %v388, %v1644
        %vm1729 = vcmp.eq.s32.totalorder %v388, %v1658
        %vm1730 = vcmp.eq.s32.totalorder %v388, %v1672
        %vm1731 = vcmp.eq.s32.totalorder %v388, %v1686
        %vm1732 = vcmp.eq.s32.totalorder %v388, %v1700
        %v1733 = vsel %vm1701, 1, 0
        %v1734 = vsel %vm1702, 1, 0
        %v1735 = vsel %vm1703, 1, 0
        %v1736 = vsel %vm1704, 1, 0
        %v1737 = vsel %vm1705, 1, 0
        %v1738 = vsel %vm1706, 1, 0
        %v1739 = vsel %vm1707, 1, 0
        %v1740 = vsel %vm1708, 1, 0
        %v1741 = vsel %vm1709, 1, 0
        %v1742 = vsel %vm1710, 1, 0
        %v1743 = vsel %vm1711, 1, 0
        %v1744 = vsel %vm1712, 1, 0
        %v1745 = vsel %vm1713, 1, 0
        %v1746 = vsel %vm1714, 1, 0
        %v1747 = vsel %vm1715, 1, 0
        %v1748 = vsel %vm1716, 1, 0
        %v1749 = vsel %vm1717, 1, 0
        %v1750 = vsel %vm1718, 1, 0
        %v1751 = vsel %vm1719, 1, 0
        %v1752 = vsel %vm1720, 1, 0
        %v1753 = vsel %vm1721, 1, 0
        %v1754 = vsel %vm1722, 1, 0
        %v1755 = vsel %vm1723, 1, 0
        %v1756 = vsel %vm1724, 1, 0
        %v1757 = vsel %vm1725, 1, 0
        %v1758 = vsel %vm1726, 1, 0
        %v1759 = vsel %vm1727, 1, 0
        %v1760 = vsel %vm1728, 1, 0
        %v1761 = vsel %vm1729, 1, 0
        %v1762 = vsel %vm1730, 1, 0
        %v1763 = vsel %vm1731, 1, 0
        %v1764 = vsel %vm1732, 1, 0
        %v1765 = vcvt.s32.f32 %v1733
        %v1766 = vcvt.s32.f32 %v1734
        %v1767 = vcvt.s32.f32 %v1735
        %v1768 = vcvt.s32.f32 %v1736
        %v1769 = vcvt.s32.f32 %v1737
        %v1770 = vcvt.s32.f32 %v1738
        %v1771 = vcvt.s32.f32 %v1739
        %v1772 = vcvt.s32.f32 %v1740
        %v1773 = vcvt.s32.f32 %v1741
        %v1774 = vcvt.s32.f32 %v1742
        %v1775 = vcvt.s32.f32 %v1743
        %v1776 = vcvt.s32.f32 %v1744
        %v1777 = vcvt.s32.f32 %v1745
        %v1778 = vcvt.s32.f32 %v1746
        %v1779 = vcvt.s32.f32 %v1747
        %v1780 = vcvt.s32.f32 %v1748
        %v1781 = vcvt.s32.f32 %v1749
        %v1782 = vcvt.s32.f32 %v1750
        %v1783 = vcvt.s32.f32 %v1751
        %v1784 = vcvt.s32.f32 %v1752
        %v1785 = vcvt.s32.f32 %v1753
        %v1786 = vcvt.s32.f32 %v1754
        %v1787 = vcvt.s32.f32 %v1755
        %v1788 = vcvt.s32.f32 %v1756
        %v1789 = vcvt.s32.f32 %v1757
        %v1790 = vcvt.s32.f32 %v1758
        %v1791 = vcvt.s32.f32 %v1759
        %v1792 = vcvt.s32.f32 %v1760
        %v1793 = vcvt.s32.f32 %v1761
        %v1794 = vcvt.s32.f32 %v1762
        %v1795 = vcvt.s32.f32 %v1763
        %v1796 = vcvt.s32.f32 %v1764
        %v1797 = vadd.f32 %v1061, %v1765
        %v1798 = vadd.f32 %v1062, %v1766
        %v1799 = vadd.f32 %v1063, %v1767
        %v1800 = vadd.f32 %v1064, %v1768
        %v1801 = vadd.f32 %v1065, %v1769
        %v1802 = vadd.f32 %v1066, %v1770
        %v1803 = vadd.f32 %v1067, %v1771
        %v1804 = vadd.f32 %v1068, %v1772
        %v1805 = vadd.f32 %v1069, %v1773
        %v1806 = vadd.f32 %v1070, %v1774
        %v1807 = vadd.f32 %v1071, %v1775
        %v1808 = vadd.f32 %v1072, %v1776
        %v1809 = vadd.f32 %v1073, %v1777
        %v1810 = vadd.f32 %v1074, %v1778
        %v1811 = vadd.f32 %v1075, %v1779
        %v1812 = vadd.f32 %v1076, %v1780
        %v1813 = vadd.f32 %v1077, %v1781
        %v1814 = vadd.f32 %v1078, %v1782
        %v1815 = vadd.f32 %v1079, %v1783
        %v1816 = vadd.f32 %v1080, %v1784
        %v1817 = vadd.f32 %v1081, %v1785
        %v1818 = vadd.f32 %v1082, %v1786
        %v1819 = vadd.f32 %v1083, %v1787
        %v1820 = vadd.f32 %v1084, %v1788
        %v1821 = vadd.f32 %v1085, %v1789
        %v1822 = vadd.f32 %v1086, %v1790
        %v1823 = vadd.f32 %v1087, %v1791
        %v1824 = vadd.f32 %v1088, %v1792
        %v1825 = vadd.f32 %v1089, %v1793
        %v1826 = vadd.f32 %v1090, %v1794
        %v1827 = vadd.f32 %v1091, %v1795
        %v1828 = vadd.f32 %v1092, %v1796
        %v1829 = vsel %vm1701, inf, %v1093
        %v1830 = vsel %vm1702, inf, %v1094
        %v1831 = vsel %vm1703, inf, %v1095
        %v1832 = vsel %vm1704, inf, %v1096
        %v1833 = vsel %vm1705, inf, %v1097
        %v1834 = vsel %vm1706, inf, %v1098
        %v1835 = vsel %vm1707, inf, %v1099
        %v1836 = vsel %vm1708, inf, %v1100
        %v1837 = vsel %vm1709, inf, %v1101
        %v1838 = vsel %vm1710, inf, %v1102
        %v1839 = vsel %vm1711, inf, %v1103
        %v1840 = vsel %vm1712, inf, %v1104
        %v1841 = vsel %vm1713, inf, %v1105
        %v1842 = vsel %vm1714, inf, %v1106
        %v1843 = vsel %vm1715, inf, %v1107
        %v1844 = vsel %vm1716, inf, %v1108
        %v1845 = vsel %vm1717, inf, %v1109
        %v1846 = vsel %vm1718, inf, %v1110
        %v1847 = vsel %vm1719, inf, %v1111
        %v1848 = vsel %vm1720, inf, %v1112
        %v1849 = vsel %vm1721, inf, %v1113
        %v1850 = vsel %vm1722, inf, %v1114
        %v1851 = vsel %vm1723, inf, %v1115
        %v1852 = vsel %vm1724, inf, %v1116
        %v1853 = vsel %vm1725, inf, %v1117
        %v1854 = vsel %vm1726, inf, %v1118
        %v1855 = vsel %vm1727, inf, %v1119
        %v1856 = vsel %vm1728, inf, %v1120
        %v1857 = vsel %vm1729, inf, %v1121
        %v1858 = vsel %vm1730, inf, %v1122
        %v1859 = vsel %vm1731, inf, %v1123
        %v1860 = vsel %vm1732, inf, %v1124
        %1861 = vmin.xlane.f32.xlu0 %v1829
        %v1862 = vpop.xlane.xlu0 %1861
        %1863 = vmin.xlane.f32.xlu0 %v1830
        %v1864 = vpop.xlane.xlu0 %1863
        %1865 = vmin.xlane.f32.xlu0 %v1831
        %v1866 = vpop.xlane.xlu0 %1865
        %1867 = vmin.xlane.f32.xlu0 %v1832
        %v1868 = vpop.xlane.xlu0 %1867
        %1869 = vmin.xlane.f32.xlu0 %v1833
        %v1870 = vpop.xlane.xlu0 %1869
        %1871 = vmin.xlane.f32.xlu0 %v1834
        %v1872 = vpop.xlane.xlu0 %1871
        %1873 = vmin.xlane.f32.xlu0 %v1835
        %v1874 = vpop.xlane.xlu0 %1873
        %1875 = vmin.xlane.f32.xlu0 %v1836
        %v1876 = vpop.xlane.xlu0 %1875
        %1877 = vmin.xlane.f32.xlu0 %v1837
        %v1878 = vpop.xlane.xlu0 %1877
        %1879 = vmin.xlane.f32.xlu0 %v1838
        %v1880 = vpop.xlane.xlu0 %1879
        %1881 = vmin.xlane.f32.xlu0 %v1839
        %v1882 = vpop.xlane.xlu0 %1881
        %1883 = vmin.xlane.f32.xlu0 %v1840
        %v1884 = vpop.xlane.xlu0 %1883
        %1885 = vmin.xlane.f32.xlu0 %v1841
        %v1886 = vpop.xlane.xlu0 %1885
        %1887 = vmin.xlane.f32.xlu0 %v1842
        %v1888 = vpop.xlane.xlu0 %1887
        %1889 = vmin.xlane.f32.xlu0 %v1843
        %v1890 = vpop.xlane.xlu0 %1889
        %1891 = vmin.xlane.f32.xlu0 %v1844
        %v1892 = vpop.xlane.xlu0 %1891
        %1893 = vmin.xlane.f32.xlu0 %v1845
        %v1894 = vpop.xlane.xlu0 %1893
        %1895 = vmin.xlane.f32.xlu0 %v1846
        %v1896 = vpop.xlane.xlu0 %1895
        %1897 = vmin.xlane.f32.xlu0 %v1847
        %v1898 = vpop.xlane.xlu0 %1897
        %1899 = vmin.xlane.f32.xlu0 %v1848
        %v1900 = vpop.xlane.xlu0 %1899
        %1901 = vmin.xlane.f32.xlu0 %v1849
        %v1902 = vpop.xlane.xlu0 %1901
        %1903 = vmin.xlane.f32.xlu0 %v1850
        %v1904 = vpop.xlane.xlu0 %1903
        %1905 = vmin.xlane.f32.xlu0 %v1851
        %v1906 = vpop.xlane.xlu0 %1905
        %1907 = vmin.xlane.f32.xlu0 %v1852
        %v1908 = vpop.xlane.xlu0 %1907
        %1909 = vmin.xlane.f32.xlu0 %v1853
        %v1910 = vpop.xlane.xlu0 %1909
        %1911 = vmin.xlane.f32.xlu0 %v1854
        %v1912 = vpop.xlane.xlu0 %1911
        %1913 = vmin.xlane.f32.xlu0 %v1855
        %v1914 = vpop.xlane.xlu0 %1913
        %1915 = vmin.xlane.f32.xlu0 %v1856
        %v1916 = vpop.xlane.xlu0 %1915
        %1917 = vmin.xlane.f32.xlu0 %v1857
        %v1918 = vpop.xlane.xlu0 %1917
        %1919 = vmin.xlane.f32.xlu0 %v1858
        %v1920 = vpop.xlane.xlu0 %1919
        %1921 = vmin.xlane.f32.xlu0 %v1859
        %v1922 = vpop.xlane.xlu0 %1921
        %1923 = vmin.xlane.f32.xlu0 %v1860
        %v1924 = vpop.xlane.xlu0 %1923
        %vm1925 = vcmp.eq.f32.partialorder %v1829, %v1862
        %vm1926 = vcmp.eq.f32.partialorder %v1830, %v1864
        %vm1927 = vcmp.eq.f32.partialorder %v1831, %v1866
        %vm1928 = vcmp.eq.f32.partialorder %v1832, %v1868
        %vm1929 = vcmp.eq.f32.partialorder %v1833, %v1870
        %vm1930 = vcmp.eq.f32.partialorder %v1834, %v1872
        %vm1931 = vcmp.eq.f32.partialorder %v1835, %v1874
        %vm1932 = vcmp.eq.f32.partialorder %v1836, %v1876
        %vm1933 = vcmp.eq.f32.partialorder %v1837, %v1878
        %vm1934 = vcmp.eq.f32.partialorder %v1838, %v1880
        %vm1935 = vcmp.eq.f32.partialorder %v1839, %v1882
        %vm1936 = vcmp.eq.f32.partialorder %v1840, %v1884
        %vm1937 = vcmp.eq.f32.partialorder %v1841, %v1886
        %vm1938 = vcmp.eq.f32.partialorder %v1842, %v1888
        %vm1939 = vcmp.eq.f32.partialorder %v1843, %v1890
        %vm1940 = vcmp.eq.f32.partialorder %v1844, %v1892
        %vm1941 = vcmp.eq.f32.partialorder %v1845, %v1894
        %vm1942 = vcmp.eq.f32.partialorder %v1846, %v1896
        %vm1943 = vcmp.eq.f32.partialorder %v1847, %v1898
        %vm1944 = vcmp.eq.f32.partialorder %v1848, %v1900
        %vm1945 = vcmp.eq.f32.partialorder %v1849, %v1902
        %vm1946 = vcmp.eq.f32.partialorder %v1850, %v1904
        %vm1947 = vcmp.eq.f32.partialorder %v1851, %v1906
        %vm1948 = vcmp.eq.f32.partialorder %v1852, %v1908
        %vm1949 = vcmp.eq.f32.partialorder %v1853, %v1910
        %vm1950 = vcmp.eq.f32.partialorder %v1854, %v1912
        %vm1951 = vcmp.eq.f32.partialorder %v1855, %v1914
        %vm1952 = vcmp.eq.f32.partialorder %v1856, %v1916
        %vm1953 = vcmp.eq.f32.partialorder %v1857, %v1918
        %vm1954 = vcmp.eq.f32.partialorder %v1858, %v1920
        %vm1955 = vcmp.eq.f32.partialorder %v1859, %v1922
        %vm1956 = vcmp.eq.f32.partialorder %v1860, %v1924
        %v1957 = vsel %vm1925, %v388, 128
        %v1958 = vsel %vm1926, %v388, 128
        %v1959 = vsel %vm1927, %v388, 128
        %v1960 = vsel %vm1928, %v388, 128
        %v1961 = vsel %vm1929, %v388, 128
        %v1962 = vsel %vm1930, %v388, 128
        %v1963 = vsel %vm1931, %v388, 128
        %v1964 = vsel %vm1932, %v388, 128
        %v1965 = vsel %vm1933, %v388, 128
        %v1966 = vsel %vm1934, %v388, 128
        %v1967 = vsel %vm1935, %v388, 128
        %v1968 = vsel %vm1936, %v388, 128
        %v1969 = vsel %vm1937, %v388, 128
        %v1970 = vsel %vm1938, %v388, 128
        %v1971 = vsel %vm1939, %v388, 128
        %v1972 = vsel %vm1940, %v388, 128
        %v1973 = vsel %vm1941, %v388, 128
        %v1974 = vsel %vm1942, %v388, 128
        %v1975 = vsel %vm1943, %v388, 128
        %v1976 = vsel %vm1944, %v388, 128
        %v1977 = vsel %vm1945, %v388, 128
        %v1978 = vsel %vm1946, %v388, 128
        %v1979 = vsel %vm1947, %v388, 128
        %v1980 = vsel %vm1948, %v388, 128
        %v1981 = vsel %vm1949, %v388, 128
        %v1982 = vsel %vm1950, %v388, 128
        %v1983 = vsel %vm1951, %v388, 128
        %v1984 = vsel %vm1952, %v388, 128
        %v1985 = vsel %vm1953, %v388, 128
        %v1986 = vsel %vm1954, %v388, 128
        %v1987 = vsel %vm1955, %v388, 128
        %v1988 = vsel %vm1956, %v388, 128
        %v1989 = vand.u32 %v1957, 65535
        %v1990 = vshra.s32 %v1957, 16
        %v1991 = vcvt.s32.f32 %v1989
        %v1992 = vcvt.s32.f32 %v1990
        %1993 = vmin.xlane.f32.xlu0 %v1992
        %v1994 = vpop.xlane.xlu0 %1993
        %vm1995 = vcmp.eq.f32.partialorder %v1992, %v1994
        %v1996 = vsel %vm1995, %v1991, inf
        %1997 = vmin.xlane.f32.xlu0 %v1996
        %v1998 = vpop.xlane.xlu0 %1997
        %v1999 = vcvt.f32.s32 %v1998
        %v2000 = vcvt.f32.s32 %v1994
        %v2001 = vshll.u32 %v2000, 16
        %v2002 = vadd.s32 %v2001, %v1999
        %v2003 = vand.u32 %v1958, 65535
        %v2004 = vshra.s32 %v1958, 16
        %v2005 = vcvt.s32.f32 %v2003
        %v2006 = vcvt.s32.f32 %v2004
        %2007 = vmin.xlane.f32.xlu0 %v2006
        %v2008 = vpop.xlane.xlu0 %2007
        %vm2009 = vcmp.eq.f32.partialorder %v2006, %v2008
        %v2010 = vsel %vm2009, %v2005, inf
        %2011 = vmin.xlane.f32.xlu0 %v2010
        %v2012 = vpop.xlane.xlu0 %2011
        %v2013 = vcvt.f32.s32 %v2012
        %v2014 = vcvt.f32.s32 %v2008
        %v2015 = vshll.u32 %v2014, 16
        %v2016 = vadd.s32 %v2015, %v2013
        %v2017 = vand.u32 %v1959, 65535
        %v2018 = vshra.s32 %v1959, 16
        %v2019 = vcvt.s32.f32 %v2017
        %v2020 = vcvt.s32.f32 %v2018
        %2021 = vmin.xlane.f32.xlu0 %v2020
        %v2022 = vpop.xlane.xlu0 %2021
        %vm2023 = vcmp.eq.f32.partialorder %v2020, %v2022
        %v2024 = vsel %vm2023, %v2019, inf
        %2025 = vmin.xlane.f32.xlu0 %v2024
        %v2026 = vpop.xlane.xlu0 %2025
        %v2027 = vcvt.f32.s32 %v2026
        %v2028 = vcvt.f32.s32 %v2022
        %v2029 = vshll.u32 %v2028, 16
        %v2030 = vadd.s32 %v2029, %v2027
        %v2031 = vand.u32 %v1960, 65535
        %v2032 = vshra.s32 %v1960, 16
        %v2033 = vcvt.s32.f32 %v2031
        %v2034 = vcvt.s32.f32 %v2032
        %2035 = vmin.xlane.f32.xlu0 %v2034
        %v2036 = vpop.xlane.xlu0 %2035
        %vm2037 = vcmp.eq.f32.partialorder %v2034, %v2036
        %v2038 = vsel %vm2037, %v2033, inf
        %2039 = vmin.xlane.f32.xlu0 %v2038
        %v2040 = vpop.xlane.xlu0 %2039
        %v2041 = vcvt.f32.s32 %v2040
        %v2042 = vcvt.f32.s32 %v2036
        %v2043 = vshll.u32 %v2042, 16
        %v2044 = vadd.s32 %v2043, %v2041
        %v2045 = vand.u32 %v1961, 65535
        %v2046 = vshra.s32 %v1961, 16
        %v2047 = vcvt.s32.f32 %v2045
        %v2048 = vcvt.s32.f32 %v2046
        %2049 = vmin.xlane.f32.xlu0 %v2048
        %v2050 = vpop.xlane.xlu0 %2049
        %vm2051 = vcmp.eq.f32.partialorder %v2048, %v2050
        %v2052 = vsel %vm2051, %v2047, inf
        %2053 = vmin.xlane.f32.xlu0 %v2052
        %v2054 = vpop.xlane.xlu0 %2053
        %v2055 = vcvt.f32.s32 %v2054
        %v2056 = vcvt.f32.s32 %v2050
        %v2057 = vshll.u32 %v2056, 16
        %v2058 = vadd.s32 %v2057, %v2055
        %v2059 = vand.u32 %v1962, 65535
        %v2060 = vshra.s32 %v1962, 16
        %v2061 = vcvt.s32.f32 %v2059
        %v2062 = vcvt.s32.f32 %v2060
        %2063 = vmin.xlane.f32.xlu0 %v2062
        %v2064 = vpop.xlane.xlu0 %2063
        %vm2065 = vcmp.eq.f32.partialorder %v2062, %v2064
        %v2066 = vsel %vm2065, %v2061, inf
        %2067 = vmin.xlane.f32.xlu0 %v2066
        %v2068 = vpop.xlane.xlu0 %2067
        %v2069 = vcvt.f32.s32 %v2068
        %v2070 = vcvt.f32.s32 %v2064
        %v2071 = vshll.u32 %v2070, 16
        %v2072 = vadd.s32 %v2071, %v2069
        %v2073 = vand.u32 %v1963, 65535
        %v2074 = vshra.s32 %v1963, 16
        %v2075 = vcvt.s32.f32 %v2073
        %v2076 = vcvt.s32.f32 %v2074
        %2077 = vmin.xlane.f32.xlu0 %v2076
        %v2078 = vpop.xlane.xlu0 %2077
        %vm2079 = vcmp.eq.f32.partialorder %v2076, %v2078
        %v2080 = vsel %vm2079, %v2075, inf
        %2081 = vmin.xlane.f32.xlu0 %v2080
        %v2082 = vpop.xlane.xlu0 %2081
        %v2083 = vcvt.f32.s32 %v2082
        %v2084 = vcvt.f32.s32 %v2078
        %v2085 = vshll.u32 %v2084, 16
        %v2086 = vadd.s32 %v2085, %v2083
        %v2087 = vand.u32 %v1964, 65535
        %v2088 = vshra.s32 %v1964, 16
        %v2089 = vcvt.s32.f32 %v2087
        %v2090 = vcvt.s32.f32 %v2088
        %2091 = vmin.xlane.f32.xlu0 %v2090
        %v2092 = vpop.xlane.xlu0 %2091
        %vm2093 = vcmp.eq.f32.partialorder %v2090, %v2092
        %v2094 = vsel %vm2093, %v2089, inf
        %2095 = vmin.xlane.f32.xlu0 %v2094
        %v2096 = vpop.xlane.xlu0 %2095
        %v2097 = vcvt.f32.s32 %v2096
        %v2098 = vcvt.f32.s32 %v2092
        %v2099 = vshll.u32 %v2098, 16
        %v2100 = vadd.s32 %v2099, %v2097
        %v2101 = vand.u32 %v1965, 65535
        %v2102 = vshra.s32 %v1965, 16
        %v2103 = vcvt.s32.f32 %v2101
        %v2104 = vcvt.s32.f32 %v2102
        %2105 = vmin.xlane.f32.xlu0 %v2104
        %v2106 = vpop.xlane.xlu0 %2105
        %vm2107 = vcmp.eq.f32.partialorder %v2104, %v2106
        %v2108 = vsel %vm2107, %v2103, inf
        %2109 = vmin.xlane.f32.xlu0 %v2108
        %v2110 = vpop.xlane.xlu0 %2109
        %v2111 = vcvt.f32.s32 %v2110
        %v2112 = vcvt.f32.s32 %v2106
        %v2113 = vshll.u32 %v2112, 16
        %v2114 = vadd.s32 %v2113, %v2111
        %v2115 = vand.u32 %v1966, 65535
        %v2116 = vshra.s32 %v1966, 16
        %v2117 = vcvt.s32.f32 %v2115
        %v2118 = vcvt.s32.f32 %v2116
        %2119 = vmin.xlane.f32.xlu0 %v2118
        %v2120 = vpop.xlane.xlu0 %2119
        %vm2121 = vcmp.eq.f32.partialorder %v2118, %v2120
        %v2122 = vsel %vm2121, %v2117, inf
        %2123 = vmin.xlane.f32.xlu0 %v2122
        %v2124 = vpop.xlane.xlu0 %2123
        %v2125 = vcvt.f32.s32 %v2124
        %v2126 = vcvt.f32.s32 %v2120
        %v2127 = vshll.u32 %v2126, 16
        %v2128 = vadd.s32 %v2127, %v2125
        %v2129 = vand.u32 %v1967, 65535
        %v2130 = vshra.s32 %v1967, 16
        %v2131 = vcvt.s32.f32 %v2129
        %v2132 = vcvt.s32.f32 %v2130
        %2133 = vmin.xlane.f32.xlu0 %v2132
        %v2134 = vpop.xlane.xlu0 %2133
        %vm2135 = vcmp.eq.f32.partialorder %v2132, %v2134
        %v2136 = vsel %vm2135, %v2131, inf
        %2137 = vmin.xlane.f32.xlu0 %v2136
        %v2138 = vpop.xlane.xlu0 %2137
        %v2139 = vcvt.f32.s32 %v2138
        %v2140 = vcvt.f32.s32 %v2134
        %v2141 = vshll.u32 %v2140, 16
        %v2142 = vadd.s32 %v2141, %v2139
        %v2143 = vand.u32 %v1968, 65535
        %v2144 = vshra.s32 %v1968, 16
        %v2145 = vcvt.s32.f32 %v2143
        %v2146 = vcvt.s32.f32 %v2144
        %2147 = vmin.xlane.f32.xlu0 %v2146
        %v2148 = vpop.xlane.xlu0 %2147
        %vm2149 = vcmp.eq.f32.partialorder %v2146, %v2148
        %v2150 = vsel %vm2149, %v2145, inf
        %2151 = vmin.xlane.f32.xlu0 %v2150
        %v2152 = vpop.xlane.xlu0 %2151
        %v2153 = vcvt.f32.s32 %v2152
        %v2154 = vcvt.f32.s32 %v2148
        %v2155 = vshll.u32 %v2154, 16
        %v2156 = vadd.s32 %v2155, %v2153
        %v2157 = vand.u32 %v1969, 65535
        %v2158 = vshra.s32 %v1969, 16
        %v2159 = vcvt.s32.f32 %v2157
        %v2160 = vcvt.s32.f32 %v2158
        %2161 = vmin.xlane.f32.xlu0 %v2160
        %v2162 = vpop.xlane.xlu0 %2161
        %vm2163 = vcmp.eq.f32.partialorder %v2160, %v2162
        %v2164 = vsel %vm2163, %v2159, inf
        %2165 = vmin.xlane.f32.xlu0 %v2164
        %v2166 = vpop.xlane.xlu0 %2165
        %v2167 = vcvt.f32.s32 %v2166
        %v2168 = vcvt.f32.s32 %v2162
        %v2169 = vshll.u32 %v2168, 16
        %v2170 = vadd.s32 %v2169, %v2167
        %v2171 = vand.u32 %v1970, 65535
        %v2172 = vshra.s32 %v1970, 16
        %v2173 = vcvt.s32.f32 %v2171
        %v2174 = vcvt.s32.f32 %v2172
        %2175 = vmin.xlane.f32.xlu0 %v2174
        %v2176 = vpop.xlane.xlu0 %2175
        %vm2177 = vcmp.eq.f32.partialorder %v2174, %v2176
        %v2178 = vsel %vm2177, %v2173, inf
        %2179 = vmin.xlane.f32.xlu0 %v2178
        %v2180 = vpop.xlane.xlu0 %2179
        %v2181 = vcvt.f32.s32 %v2180
        %v2182 = vcvt.f32.s32 %v2176
        %v2183 = vshll.u32 %v2182, 16
        %v2184 = vadd.s32 %v2183, %v2181
        %v2185 = vand.u32 %v1971, 65535
        %v2186 = vshra.s32 %v1971, 16
        %v2187 = vcvt.s32.f32 %v2185
        %v2188 = vcvt.s32.f32 %v2186
        %2189 = vmin.xlane.f32.xlu0 %v2188
        %v2190 = vpop.xlane.xlu0 %2189
        %vm2191 = vcmp.eq.f32.partialorder %v2188, %v2190
        %v2192 = vsel %vm2191, %v2187, inf
        %2193 = vmin.xlane.f32.xlu0 %v2192
        %v2194 = vpop.xlane.xlu0 %2193
        %v2195 = vcvt.f32.s32 %v2194
        %v2196 = vcvt.f32.s32 %v2190
        %v2197 = vshll.u32 %v2196, 16
        %v2198 = vadd.s32 %v2197, %v2195
        %v2199 = vand.u32 %v1972, 65535
        %v2200 = vshra.s32 %v1972, 16
        %v2201 = vcvt.s32.f32 %v2199
        %v2202 = vcvt.s32.f32 %v2200
        %2203 = vmin.xlane.f32.xlu0 %v2202
        %v2204 = vpop.xlane.xlu0 %2203
        %vm2205 = vcmp.eq.f32.partialorder %v2202, %v2204
        %v2206 = vsel %vm2205, %v2201, inf
        %2207 = vmin.xlane.f32.xlu0 %v2206
        %v2208 = vpop.xlane.xlu0 %2207
        %v2209 = vcvt.f32.s32 %v2208
        %v2210 = vcvt.f32.s32 %v2204
        %v2211 = vshll.u32 %v2210, 16
        %v2212 = vadd.s32 %v2211, %v2209
        %v2213 = vand.u32 %v1973, 65535
        %v2214 = vshra.s32 %v1973, 16
        %v2215 = vcvt.s32.f32 %v2213
        %v2216 = vcvt.s32.f32 %v2214
        %2217 = vmin.xlane.f32.xlu0 %v2216
        %v2218 = vpop.xlane.xlu0 %2217
        %vm2219 = vcmp.eq.f32.partialorder %v2216, %v2218
        %v2220 = vsel %vm2219, %v2215, inf
        %2221 = vmin.xlane.f32.xlu0 %v2220
        %v2222 = vpop.xlane.xlu0 %2221
        %v2223 = vcvt.f32.s32 %v2222
        %v2224 = vcvt.f32.s32 %v2218
        %v2225 = vshll.u32 %v2224, 16
        %v2226 = vadd.s32 %v2225, %v2223
        %v2227 = vand.u32 %v1974, 65535
        %v2228 = vshra.s32 %v1974, 16
        %v2229 = vcvt.s32.f32 %v2227
        %v2230 = vcvt.s32.f32 %v2228
        %2231 = vmin.xlane.f32.xlu0 %v2230
        %v2232 = vpop.xlane.xlu0 %2231
        %vm2233 = vcmp.eq.f32.partialorder %v2230, %v2232
        %v2234 = vsel %vm2233, %v2229, inf
        %2235 = vmin.xlane.f32.xlu0 %v2234
        %v2236 = vpop.xlane.xlu0 %2235
        %v2237 = vcvt.f32.s32 %v2236
        %v2238 = vcvt.f32.s32 %v2232
        %v2239 = vshll.u32 %v2238, 16
        %v2240 = vadd.s32 %v2239, %v2237
        %v2241 = vand.u32 %v1975, 65535
        %v2242 = vshra.s32 %v1975, 16
        %v2243 = vcvt.s32.f32 %v2241
        %v2244 = vcvt.s32.f32 %v2242
        %2245 = vmin.xlane.f32.xlu0 %v2244
        %v2246 = vpop.xlane.xlu0 %2245
        %vm2247 = vcmp.eq.f32.partialorder %v2244, %v2246
        %v2248 = vsel %vm2247, %v2243, inf
        %2249 = vmin.xlane.f32.xlu0 %v2248
        %v2250 = vpop.xlane.xlu0 %2249
        %v2251 = vcvt.f32.s32 %v2250
        %v2252 = vcvt.f32.s32 %v2246
        %v2253 = vshll.u32 %v2252, 16
        %v2254 = vadd.s32 %v2253, %v2251
        %v2255 = vand.u32 %v1976, 65535
        %v2256 = vshra.s32 %v1976, 16
        %v2257 = vcvt.s32.f32 %v2255
        %v2258 = vcvt.s32.f32 %v2256
        %2259 = vmin.xlane.f32.xlu0 %v2258
        %v2260 = vpop.xlane.xlu0 %2259
        %vm2261 = vcmp.eq.f32.partialorder %v2258, %v2260
        %v2262 = vsel %vm2261, %v2257, inf
        %2263 = vmin.xlane.f32.xlu0 %v2262
        %v2264 = vpop.xlane.xlu0 %2263
        %v2265 = vcvt.f32.s32 %v2264
        %v2266 = vcvt.f32.s32 %v2260
        %v2267 = vshll.u32 %v2266, 16
        %v2268 = vadd.s32 %v2267, %v2265
        %v2269 = vand.u32 %v1977, 65535
        %v2270 = vshra.s32 %v1977, 16
        %v2271 = vcvt.s32.f32 %v2269
        %v2272 = vcvt.s32.f32 %v2270
        %2273 = vmin.xlane.f32.xlu0 %v2272
        %v2274 = vpop.xlane.xlu0 %2273
        %vm2275 = vcmp.eq.f32.partialorder %v2272, %v2274
        %v2276 = vsel %vm2275, %v2271, inf
        %2277 = vmin.xlane.f32.xlu0 %v2276
        %v2278 = vpop.xlane.xlu0 %2277
        %v2279 = vcvt.f32.s32 %v2278
        %v2280 = vcvt.f32.s32 %v2274
        %v2281 = vshll.u32 %v2280, 16
        %v2282 = vadd.s32 %v2281, %v2279
        %v2283 = vand.u32 %v1978, 65535
        %v2284 = vshra.s32 %v1978, 16
        %v2285 = vcvt.s32.f32 %v2283
        %v2286 = vcvt.s32.f32 %v2284
        %2287 = vmin.xlane.f32.xlu0 %v2286
        %v2288 = vpop.xlane.xlu0 %2287
        %vm2289 = vcmp.eq.f32.partialorder %v2286, %v2288
        %v2290 = vsel %vm2289, %v2285, inf
        %2291 = vmin.xlane.f32.xlu0 %v2290
        %v2292 = vpop.xlane.xlu0 %2291
        %v2293 = vcvt.f32.s32 %v2292
        %v2294 = vcvt.f32.s32 %v2288
        %v2295 = vshll.u32 %v2294, 16
        %v2296 = vadd.s32 %v2295, %v2293
        %v2297 = vand.u32 %v1979, 65535
        %v2298 = vshra.s32 %v1979, 16
        %v2299 = vcvt.s32.f32 %v2297
        %v2300 = vcvt.s32.f32 %v2298
        %2301 = vmin.xlane.f32.xlu0 %v2300
        %v2302 = vpop.xlane.xlu0 %2301
        %vm2303 = vcmp.eq.f32.partialorder %v2300, %v2302
        %v2304 = vsel %vm2303, %v2299, inf
        %2305 = vmin.xlane.f32.xlu0 %v2304
        %v2306 = vpop.xlane.xlu0 %2305
        %v2307 = vcvt.f32.s32 %v2306
        %v2308 = vcvt.f32.s32 %v2302
        %v2309 = vshll.u32 %v2308, 16
        %v2310 = vadd.s32 %v2309, %v2307
        %v2311 = vand.u32 %v1980, 65535
        %v2312 = vshra.s32 %v1980, 16
        %v2313 = vcvt.s32.f32 %v2311
        %v2314 = vcvt.s32.f32 %v2312
        %2315 = vmin.xlane.f32.xlu0 %v2314
        %v2316 = vpop.xlane.xlu0 %2315
        %vm2317 = vcmp.eq.f32.partialorder %v2314, %v2316
        %v2318 = vsel %vm2317, %v2313, inf
        %2319 = vmin.xlane.f32.xlu0 %v2318
        %v2320 = vpop.xlane.xlu0 %2319
        %v2321 = vcvt.f32.s32 %v2320
        %v2322 = vcvt.f32.s32 %v2316
        %v2323 = vshll.u32 %v2322, 16
        %v2324 = vadd.s32 %v2323, %v2321
        %v2325 = vand.u32 %v1981, 65535
        %v2326 = vshra.s32 %v1981, 16
        %v2327 = vcvt.s32.f32 %v2325
        %v2328 = vcvt.s32.f32 %v2326
        %2329 = vmin.xlane.f32.xlu0 %v2328
        %v2330 = vpop.xlane.xlu0 %2329
        %vm2331 = vcmp.eq.f32.partialorder %v2328, %v2330
        %v2332 = vsel %vm2331, %v2327, inf
        %2333 = vmin.xlane.f32.xlu0 %v2332
        %v2334 = vpop.xlane.xlu0 %2333
        %v2335 = vcvt.f32.s32 %v2334
        %v2336 = vcvt.f32.s32 %v2330
        %v2337 = vshll.u32 %v2336, 16
        %v2338 = vadd.s32 %v2337, %v2335
        %v2339 = vand.u32 %v1982, 65535
        %v2340 = vshra.s32 %v1982, 16
        %v2341 = vcvt.s32.f32 %v2339
        %v2342 = vcvt.s32.f32 %v2340
        %2343 = vmin.xlane.f32.xlu0 %v2342
        %v2344 = vpop.xlane.xlu0 %2343
        %vm2345 = vcmp.eq.f32.partialorder %v2342, %v2344
        %v2346 = vsel %vm2345, %v2341, inf
        %2347 = vmin.xlane.f32.xlu0 %v2346
        %v2348 = vpop.xlane.xlu0 %2347
        %v2349 = vcvt.f32.s32 %v2348
        %v2350 = vcvt.f32.s32 %v2344
        %v2351 = vshll.u32 %v2350, 16
        %v2352 = vadd.s32 %v2351, %v2349
        %v2353 = vand.u32 %v1983, 65535
        %v2354 = vshra.s32 %v1983, 16
        %v2355 = vcvt.s32.f32 %v2353
        %v2356 = vcvt.s32.f32 %v2354
        %2357 = vmin.xlane.f32.xlu0 %v2356
        %v2358 = vpop.xlane.xlu0 %2357
        %vm2359 = vcmp.eq.f32.partialorder %v2356, %v2358
        %v2360 = vsel %vm2359, %v2355, inf
        %2361 = vmin.xlane.f32.xlu0 %v2360
        %v2362 = vpop.xlane.xlu0 %2361
        %v2363 = vcvt.f32.s32 %v2362
        %v2364 = vcvt.f32.s32 %v2358
        %v2365 = vshll.u32 %v2364, 16
        %v2366 = vadd.s32 %v2365, %v2363
        %v2367 = vand.u32 %v1984, 65535
        %v2368 = vshra.s32 %v1984, 16
        %v2369 = vcvt.s32.f32 %v2367
        %v2370 = vcvt.s32.f32 %v2368
        %2371 = vmin.xlane.f32.xlu0 %v2370
        %v2372 = vpop.xlane.xlu0 %2371
        %vm2373 = vcmp.eq.f32.partialorder %v2370, %v2372
        %v2374 = vsel %vm2373, %v2369, inf
        %2375 = vmin.xlane.f32.xlu0 %v2374
        %v2376 = vpop.xlane.xlu0 %2375
        %v2377 = vcvt.f32.s32 %v2376
        %v2378 = vcvt.f32.s32 %v2372
        %v2379 = vshll.u32 %v2378, 16
        %v2380 = vadd.s32 %v2379, %v2377
        %v2381 = vand.u32 %v1985, 65535
        %v2382 = vshra.s32 %v1985, 16
        %v2383 = vcvt.s32.f32 %v2381
        %v2384 = vcvt.s32.f32 %v2382
        %2385 = vmin.xlane.f32.xlu0 %v2384
        %v2386 = vpop.xlane.xlu0 %2385
        %vm2387 = vcmp.eq.f32.partialorder %v2384, %v2386
        %v2388 = vsel %vm2387, %v2383, inf
        %2389 = vmin.xlane.f32.xlu0 %v2388
        %v2390 = vpop.xlane.xlu0 %2389
        %v2391 = vcvt.f32.s32 %v2390
        %v2392 = vcvt.f32.s32 %v2386
        %v2393 = vshll.u32 %v2392, 16
        %v2394 = vadd.s32 %v2393, %v2391
        %v2395 = vand.u32 %v1986, 65535
        %v2396 = vshra.s32 %v1986, 16
        %v2397 = vcvt.s32.f32 %v2395
        %v2398 = vcvt.s32.f32 %v2396
        %2399 = vmin.xlane.f32.xlu0 %v2398
        %v2400 = vpop.xlane.xlu0 %2399
        %vm2401 = vcmp.eq.f32.partialorder %v2398, %v2400
        %v2402 = vsel %vm2401, %v2397, inf
        %2403 = vmin.xlane.f32.xlu0 %v2402
        %v2404 = vpop.xlane.xlu0 %2403
        %v2405 = vcvt.f32.s32 %v2404
        %v2406 = vcvt.f32.s32 %v2400
        %v2407 = vshll.u32 %v2406, 16
        %v2408 = vadd.s32 %v2407, %v2405
        %v2409 = vand.u32 %v1987, 65535
        %v2410 = vshra.s32 %v1987, 16
        %v2411 = vcvt.s32.f32 %v2409
        %v2412 = vcvt.s32.f32 %v2410
        %2413 = vmin.xlane.f32.xlu0 %v2412
        %v2414 = vpop.xlane.xlu0 %2413
        %vm2415 = vcmp.eq.f32.partialorder %v2412, %v2414
        %v2416 = vsel %vm2415, %v2411, inf
        %2417 = vmin.xlane.f32.xlu0 %v2416
        %v2418 = vpop.xlane.xlu0 %2417
        %v2419 = vcvt.f32.s32 %v2418
        %v2420 = vcvt.f32.s32 %v2414
        %v2421 = vshll.u32 %v2420, 16
        %v2422 = vadd.s32 %v2421, %v2419
        %v2423 = vand.u32 %v1988, 65535
        %v2424 = vshra.s32 %v1988, 16
        %v2425 = vcvt.s32.f32 %v2423
        %v2426 = vcvt.s32.f32 %v2424
        %2427 = vmin.xlane.f32.xlu0 %v2426
        %v2428 = vpop.xlane.xlu0 %2427
        %vm2429 = vcmp.eq.f32.partialorder %v2426, %v2428
        %v2430 = vsel %vm2429, %v2425, inf
        %2431 = vmin.xlane.f32.xlu0 %v2430
        %v2432 = vpop.xlane.xlu0 %2431
        %v2433 = vcvt.f32.s32 %v2432
        %v2434 = vcvt.f32.s32 %v2428
        %v2435 = vshll.u32 %v2434, 16
        %v2436 = vadd.s32 %v2435, %v2433
        %vm2437 = vcmp.eq.s32.totalorder %v388, %v2002
        %vm2438 = vcmp.eq.s32.totalorder %v388, %v2016
        %vm2439 = vcmp.eq.s32.totalorder %v388, %v2030
        %vm2440 = vcmp.eq.s32.totalorder %v388, %v2044
        %vm2441 = vcmp.eq.s32.totalorder %v388, %v2058
        %vm2442 = vcmp.eq.s32.totalorder %v388, %v2072
        %vm2443 = vcmp.eq.s32.totalorder %v388, %v2086
        %vm2444 = vcmp.eq.s32.totalorder %v388, %v2100
        %vm2445 = vcmp.eq.s32.totalorder %v388, %v2114
        %vm2446 = vcmp.eq.s32.totalorder %v388, %v2128
        %vm2447 = vcmp.eq.s32.totalorder %v388, %v2142
        %vm2448 = vcmp.eq.s32.totalorder %v388, %v2156
        %vm2449 = vcmp.eq.s32.totalorder %v388, %v2170
        %vm2450 = vcmp.eq.s32.totalorder %v388, %v2184
        %vm2451 = vcmp.eq.s32.totalorder %v388, %v2198
        %vm2452 = vcmp.eq.s32.totalorder %v388, %v2212
        %vm2453 = vcmp.eq.s32.totalorder %v388, %v2226
        %vm2454 = vcmp.eq.s32.totalorder %v388, %v2240
        %vm2455 = vcmp.eq.s32.totalorder %v388, %v2254
        %vm2456 = vcmp.eq.s32.totalorder %v388, %v2268
        %vm2457 = vcmp.eq.s32.totalorder %v388, %v2282
        %vm2458 = vcmp.eq.s32.totalorder %v388, %v2296
        %vm2459 = vcmp.eq.s32.totalorder %v388, %v2310
        %vm2460 = vcmp.eq.s32.totalorder %v388, %v2324
        %vm2461 = vcmp.eq.s32.totalorder %v388, %v2338
        %vm2462 = vcmp.eq.s32.totalorder %v388, %v2352
        %vm2463 = vcmp.eq.s32.totalorder %v388, %v2366
        %vm2464 = vcmp.eq.s32.totalorder %v388, %v2380
        %vm2465 = vcmp.eq.s32.totalorder %v388, %v2394
        %vm2466 = vcmp.eq.s32.totalorder %v388, %v2408
        %vm2467 = vcmp.eq.s32.totalorder %v388, %v2422
        %vm2468 = vcmp.eq.s32.totalorder %v388, %v2436
        %v2469 = vsel %vm2437, 1, 0
        %v2470 = vsel %vm2438, 1, 0
        %v2471 = vsel %vm2439, 1, 0
        %v2472 = vsel %vm2440, 1, 0
        %v2473 = vsel %vm2441, 1, 0
        %v2474 = vsel %vm2442, 1, 0
        %v2475 = vsel %vm2443, 1, 0
        %v2476 = vsel %vm2444, 1, 0
        %v2477 = vsel %vm2445, 1, 0
        %v2478 = vsel %vm2446, 1, 0
        %v2479 = vsel %vm2447, 1, 0
        %v2480 = vsel %vm2448, 1, 0
        %v2481 = vsel %vm2449, 1, 0
        %v2482 = vsel %vm2450, 1, 0
        %v2483 = vsel %vm2451, 1, 0
        %v2484 = vsel %vm2452, 1, 0
        %v2485 = vsel %vm2453, 1, 0
        %v2486 = vsel %vm2454, 1, 0
        %v2487 = vsel %vm2455, 1, 0
        %v2488 = vsel %vm2456, 1, 0
        %v2489 = vsel %vm2457, 1, 0
        %v2490 = vsel %vm2458, 1, 0
        %v2491 = vsel %vm2459, 1, 0
        %v2492 = vsel %vm2460, 1, 0
        %v2493 = vsel %vm2461, 1, 0
        %v2494 = vsel %vm2462, 1, 0
        %v2495 = vsel %vm2463, 1, 0
        %v2496 = vsel %vm2464, 1, 0
        %v2497 = vsel %vm2465, 1, 0
        %v2498 = vsel %vm2466, 1, 0
        %v2499 = vsel %vm2467, 1, 0
        %v2500 = vsel %vm2468, 1, 0
        %v2501 = vcvt.s32.f32 %v2469
        %v2502 = vcvt.s32.f32 %v2470
        %v2503 = vcvt.s32.f32 %v2471
        %v2504 = vcvt.s32.f32 %v2472
        %v2505 = vcvt.s32.f32 %v2473
        %v2506 = vcvt.s32.f32 %v2474
        %v2507 = vcvt.s32.f32 %v2475
        %v2508 = vcvt.s32.f32 %v2476
        %v2509 = vcvt.s32.f32 %v2477
        %v2510 = vcvt.s32.f32 %v2478
        %v2511 = vcvt.s32.f32 %v2479
        %v2512 = vcvt.s32.f32 %v2480
        %v2513 = vcvt.s32.f32 %v2481
        %v2514 = vcvt.s32.f32 %v2482
        %v2515 = vcvt.s32.f32 %v2483
        %v2516 = vcvt.s32.f32 %v2484
        %v2517 = vcvt.s32.f32 %v2485
        %v2518 = vcvt.s32.f32 %v2486
        %v2519 = vcvt.s32.f32 %v2487
        %v2520 = vcvt.s32.f32 %v2488
        %v2521 = vcvt.s32.f32 %v2489
        %v2522 = vcvt.s32.f32 %v2490
        %v2523 = vcvt.s32.f32 %v2491
        %v2524 = vcvt.s32.f32 %v2492
        %v2525 = vcvt.s32.f32 %v2493
        %v2526 = vcvt.s32.f32 %v2494
        %v2527 = vcvt.s32.f32 %v2495
        %v2528 = vcvt.s32.f32 %v2496
        %v2529 = vcvt.s32.f32 %v2497
        %v2530 = vcvt.s32.f32 %v2498
        %v2531 = vcvt.s32.f32 %v2499
        %v2532 = vcvt.s32.f32 %v2500
        %v2533 = vadd.f32 %v1797, %v2501
        %v2534 = vadd.f32 %v1798, %v2502
        %v2535 = vadd.f32 %v1799, %v2503
        %v2536 = vadd.f32 %v1800, %v2504
        %v2537 = vadd.f32 %v1801, %v2505
        %v2538 = vadd.f32 %v1802, %v2506
        %v2539 = vadd.f32 %v1803, %v2507
        %v2540 = vadd.f32 %v1804, %v2508
        %v2541 = vadd.f32 %v1805, %v2509
        %v2542 = vadd.f32 %v1806, %v2510
        %v2543 = vadd.f32 %v1807, %v2511
        %v2544 = vadd.f32 %v1808, %v2512
        %v2545 = vadd.f32 %v1809, %v2513
        %v2546 = vadd.f32 %v1810, %v2514
        %v2547 = vadd.f32 %v1811, %v2515
        %v2548 = vadd.f32 %v1812, %v2516
        %v2549 = vadd.f32 %v1813, %v2517
        %v2550 = vadd.f32 %v1814, %v2518
        %v2551 = vadd.f32 %v1815, %v2519
        %v2552 = vadd.f32 %v1816, %v2520
        %v2553 = vadd.f32 %v1817, %v2521
        %v2554 = vadd.f32 %v1818, %v2522
        %v2555 = vadd.f32 %v1819, %v2523
        %v2556 = vadd.f32 %v1820, %v2524
        %v2557 = vadd.f32 %v1821, %v2525
        %v2558 = vadd.f32 %v1822, %v2526
        %v2559 = vadd.f32 %v1823, %v2527
        %v2560 = vadd.f32 %v1824, %v2528
        %v2561 = vadd.f32 %v1825, %v2529
        %v2562 = vadd.f32 %v1826, %v2530
        %v2563 = vadd.f32 %v1827, %v2531
        %v2564 = vadd.f32 %v1828, %v2532
        %v2565 = vld [vmem:[#allocation7] sm:$0xff]
        %v2566 = vld [vmem:[#allocation7 + $0x8] sm:$0xff]
        %v2567 = vld [vmem:[#allocation7 + $0x10] sm:$0xff]
        %v2568 = vld [vmem:[#allocation7 + $0x18] sm:$0xff]
        %v2569 = vld [vmem:[#allocation7 + $0x20] sm:$0xff]
        %v2570 = vld [vmem:[#allocation7 + $0x28] sm:$0xff]
        %v2571 = vld [vmem:[#allocation7 + $0x30] sm:$0xff]
        %v2572 = vld [vmem:[#allocation7 + $0x38] sm:$0xff]
        %v2573 = vld [vmem:[#allocation7 + $0x40] sm:$0xff]
        %v2574 = vld [vmem:[#allocation7 + $0x48] sm:$0xff]
        %v2575 = vld [vmem:[#allocation7 + $0x50] sm:$0xff]
        %v2576 = vld [vmem:[#allocation7 + $0x58] sm:$0xff]
        %v2577 = vld [vmem:[#allocation7 + $0x60] sm:$0xff]
        %v2578 = vld [vmem:[#allocation7 + $0x68] sm:$0xff]
        %v2579 = vld [vmem:[#allocation7 + $0x70] sm:$0xff]
        %v2580 = vld [vmem:[#allocation7 + $0x78] sm:$0xff]
        %2581 = vmatpush.msra.mxu0 %v2580
        %2582 = vmatpush.msra.mxu0 %v2579
        %2583 = vmatpush.msra.mxu0 %v2578
        %2584 = vmatpush.msra.mxu0 %v2577
        %2585 = vmatpush.msra.mxu0 %v2576
        %2586 = vmatpush.msra.mxu0 %v2575
        %2587 = vmatpush.msra.mxu0 %v2574
        %2588 = vmatpush.msra.mxu0 %v2573
        %2589 = vmatpush.msra.mxu0 %v2572
        %2590 = vmatpush.msra.mxu0 %v2571
        %2591 = vmatpush.msra.mxu0 %v2570
        %2592 = vmatpush.msra.mxu0 %v2569
        %2593 = vmatpush.msra.mxu0 %v2568
        %2594 = vmatpush.msra.mxu0 %v2567
        %2595 = vmatpush.msra.mxu0 %v2566
        %2596 = vmatpush.msra.mxu0 %v2565
        %2597 = vmatmul.f32.gmra.mxu0 %v2533
        %v2598 = vpop.f32.mrf.mxu0
        %v2599 = vadd.f32 0.0, %v2598
        %2600 = vmatmul.f32.gmra.mxu0 %v2534
        %v2601 = vpop.f32.mrf.mxu0
        %v2602 = vadd.f32 0.0, %v2601
        %2603 = vmatmul.f32.gmra.mxu0 %v2535
        %v2604 = vpop.f32.mrf.mxu0
        %v2605 = vadd.f32 0.0, %v2604
        %2606 = vmatmul.f32.gmra.mxu0 %v2536
        %v2607 = vpop.f32.mrf.mxu0
        %v2608 = vadd.f32 0.0, %v2607
        %2609 = vmatmul.f32.gmra.mxu0 %v2537
        %v2610 = vpop.f32.mrf.mxu0
        %v2611 = vadd.f32 0.0, %v2610
        %2612 = vmatmul.f32.gmra.mxu0 %v2538
        %v2613 = vpop.f32.mrf.mxu0
        %v2614 = vadd.f32 0.0, %v2613
        %2615 = vmatmul.f32.gmra.mxu0 %v2539
        %v2616 = vpop.f32.mrf.mxu0
        %v2617 = vadd.f32 0.0, %v2616
        %2618 = vmatmul.f32.gmra.mxu0 %v2540
        %v2619 = vpop.f32.mrf.mxu0
        %v2620 = vadd.f32 0.0, %v2619
        %2621 = vmatmul.f32.gmra.mxu0 %v2541
        %v2622 = vpop.f32.mrf.mxu0
        %v2623 = vadd.f32 0.0, %v2622
        %2624 = vmatmul.f32.gmra.mxu0 %v2542
        %v2625 = vpop.f32.mrf.mxu0
        %v2626 = vadd.f32 0.0, %v2625
        %2627 = vmatmul.f32.gmra.mxu0 %v2543
        %v2628 = vpop.f32.mrf.mxu0
        %v2629 = vadd.f32 0.0, %v2628
        %2630 = vmatmul.f32.gmra.mxu0 %v2544
        %v2631 = vpop.f32.mrf.mxu0
        %v2632 = vadd.f32 0.0, %v2631
        %2633 = vmatmul.f32.gmra.mxu0 %v2545
        %v2634 = vpop.f32.mrf.mxu0
        %v2635 = vadd.f32 0.0, %v2634
        %2636 = vmatmul.f32.gmra.mxu0 %v2546
        %v2637 = vpop.f32.mrf.mxu0
        %v2638 = vadd.f32 0.0, %v2637
        %2639 = vmatmul.f32.gmra.mxu0 %v2547
        %v2640 = vpop.f32.mrf.mxu0
        %v2641 = vadd.f32 0.0, %v2640
        %2642 = vmatmul.f32.gmra.mxu0 %v2548
        %v2643 = vpop.f32.mrf.mxu0
        %v2644 = vadd.f32 0.0, %v2643
        %2645 = vmatmul.f32.gmra.mxu0 %v2549
        %v2646 = vpop.f32.mrf.mxu0
        %v2647 = vadd.f32 0.0, %v2646
        %2648 = vmatmul.f32.gmra.mxu0 %v2550
        %v2649 = vpop.f32.mrf.mxu0
        %v2650 = vadd.f32 0.0, %v2649
        %2651 = vmatmul.f32.gmra.mxu0 %v2551
        %v2652 = vpop.f32.mrf.mxu0
        %v2653 = vadd.f32 0.0, %v2652
        %2654 = vmatmul.f32.gmra.mxu0 %v2552
        %v2655 = vpop.f32.mrf.mxu0
        %v2656 = vadd.f32 0.0, %v2655
        %2657 = vmatmul.f32.gmra.mxu0 %v2553
        %v2658 = vpop.f32.mrf.mxu0
        %v2659 = vadd.f32 0.0, %v2658
        %2660 = vmatmul.f32.gmra.mxu0 %v2554
        %v2661 = vpop.f32.mrf.mxu0
        %v2662 = vadd.f32 0.0, %v2661
        %2663 = vmatmul.f32.gmra.mxu0 %v2555
        %v2664 = vpop.f32.mrf.mxu0
        %v2665 = vadd.f32 0.0, %v2664
        %2666 = vmatmul.f32.gmra.mxu0 %v2556
        %v2667 = vpop.f32.mrf.mxu0
        %v2668 = vadd.f32 0.0, %v2667
        %2669 = vmatmul.f32.gmra.mxu0 %v2557
        %v2670 = vpop.f32.mrf.mxu0
        %v2671 = vadd.f32 0.0, %v2670
        %2672 = vmatmul.f32.gmra.mxu0 %v2558
        %v2673 = vpop.f32.mrf.mxu0
        %v2674 = vadd.f32 0.0, %v2673
        %2675 = vmatmul.f32.gmra.mxu0 %v2559
        %v2676 = vpop.f32.mrf.mxu0
        %v2677 = vadd.f32 0.0, %v2676
        %2678 = vmatmul.f32.gmra.mxu0 %v2560
        %v2679 = vpop.f32.mrf.mxu0
        %v2680 = vadd.f32 0.0, %v2679
        %2681 = vmatmul.f32.gmra.mxu0 %v2561
        %v2682 = vpop.f32.mrf.mxu0
        %v2683 = vadd.f32 0.0, %v2682
        %2684 = vmatmul.f32.gmra.mxu0 %v2562
        %v2685 = vpop.f32.mrf.mxu0
        %v2686 = vadd.f32 0.0, %v2685
        %2687 = vmatmul.f32.gmra.mxu0 %v2563
        %v2688 = vpop.f32.mrf.mxu0
        %v2689 = vadd.f32 0.0, %v2688
        %2690 = vmatmul.f32.gmra.mxu0 %v2564
        %v2691 = vpop.f32.mrf.mxu0
        %v2692 = vadd.f32 0.0, %v2691
        %2693 = vdwg.mxu0
        %v2694 = vmul.f32 %v2599, 0.33333334
        %v2695 = vmul.f32 %v2602, 0.33333334
        %v2696 = vmul.f32 %v2605, 0.33333334
        %v2697 = vmul.f32 %v2608, 0.33333334
        %v2698 = vmul.f32 %v2611, 0.33333334
        %v2699 = vmul.f32 %v2614, 0.33333334
        %v2700 = vmul.f32 %v2617, 0.33333334
        %v2701 = vmul.f32 %v2620, 0.33333334
        %v2702 = vmul.f32 %v2623, 0.33333334
        %v2703 = vmul.f32 %v2626, 0.33333334
        %v2704 = vmul.f32 %v2629, 0.33333334
        %v2705 = vmul.f32 %v2632, 0.33333334
        %v2706 = vmul.f32 %v2635, 0.33333334
        %v2707 = vmul.f32 %v2638, 0.33333334
        %v2708 = vmul.f32 %v2641, 0.33333334
        %v2709 = vmul.f32 %v2644, 0.33333334
        %v2710 = vmul.f32 %v2647, 0.33333334
        %v2711 = vmul.f32 %v2650, 0.33333334
        %v2712 = vmul.f32 %v2653, 0.33333334
        %v2713 = vmul.f32 %v2656, 0.33333334
        %v2714 = vmul.f32 %v2659, 0.33333334
        %v2715 = vmul.f32 %v2662, 0.33333334
        %v2716 = vmul.f32 %v2665, 0.33333334
        %v2717 = vmul.f32 %v2668, 0.33333334
        %v2718 = vmul.f32 %v2671, 0.33333334
        %v2719 = vmul.f32 %v2674, 0.33333334
        %v2720 = vmul.f32 %v2677, 0.33333334
        %v2721 = vmul.f32 %v2680, 0.33333334
        %v2722 = vmul.f32 %v2683, 0.33333334
        %v2723 = vmul.f32 %v2686, 0.33333334
        %v2724 = vmul.f32 %v2689, 0.33333334
        %v2725 = vmul.f32 %v2692, 0.33333334
        %2726 = vst [vmem:[%s223] sm:$0xff] %v2694
        %2727 = vst [vmem:[%s223 + $0x8] sm:$0xff] %v2695
        %2728 = vst [vmem:[%s223 + $0x10] sm:$0xff] %v2696
        %2729 = vst [vmem:[%s223 + $0x18] sm:$0xff] %v2697
        %2730 = vst [vmem:[%s223 + $0x20] sm:$0xff] %v2698
        %2731 = vst [vmem:[%s223 + $0x28] sm:$0xff] %v2699
        %2732 = vst [vmem:[%s223 + $0x30] sm:$0xff] %v2700
        %2733 = vst [vmem:[%s223 + $0x38] sm:$0xff] %v2701
        %2734 = vst [vmem:[%s223 + $0x40] sm:$0xff] %v2702
        %2735 = vst [vmem:[%s223 + $0x48] sm:$0xff] %v2703
        %2736 = vst [vmem:[%s223 + $0x50] sm:$0xff] %v2704
        %2737 = vst [vmem:[%s223 + $0x58] sm:$0xff] %v2705
        %2738 = vst [vmem:[%s223 + $0x60] sm:$0xff] %v2706
        %2739 = vst [vmem:[%s223 + $0x68] sm:$0xff] %v2707
        %2740 = vst [vmem:[%s223 + $0x70] sm:$0xff] %v2708
        %2741 = vst [vmem:[%s223 + $0x78] sm:$0xff] %v2709
        %2742 = vst [vmem:[%s223 + $0x80] sm:$0xff] %v2710
        %2743 = vst [vmem:[%s223 + $0x88] sm:$0xff] %v2711
        %2744 = vst [vmem:[%s223 + $0x90] sm:$0xff] %v2712
        %2745 = vst [vmem:[%s223 + $0x98] sm:$0xff] %v2713
        %2746 = vst [vmem:[%s223 + $0xa0] sm:$0xff] %v2714
        %2747 = vst [vmem:[%s223 + $0xa8] sm:$0xff] %v2715
        %2748 = vst [vmem:[%s223 + $0xb0] sm:$0xff] %v2716
        %2749 = vst [vmem:[%s223 + $0xb8] sm:$0xff] %v2717
        %2750 = vst [vmem:[%s223 + $0xc0] sm:$0xff] %v2718
        %2751 = vst [vmem:[%s223 + $0xc8] sm:$0xff] %v2719
        %2752 = vst [vmem:[%s223 + $0xd0] sm:$0xff] %v2720
        %2753 = vst [vmem:[%s223 + $0xd8] sm:$0xff] %v2721
        %2754 = vst [vmem:[%s223 + $0xe0] sm:$0xff] %v2722
        %2755 = vst [vmem:[%s223 + $0xe8] sm:$0xff] %v2723
        %2756 = vst [vmem:[%s223 + $0xf0] sm:$0xff] %v2724
        %2757 = vst [vmem:[%s223 + $0xf8] sm:$0xff] %v2725
        %s2758 = sand.u32 %s97, 1
        %s2759 = scalar_lea.sflag [#allocation4], %s2758
        %s2760 = sand.u32 %s97, 1
        %s2761 = smul.addr %s2760, 256
        %s2762 = scalar_lea.vmem [#allocation8], %s2761
        // Predicated region
        $region45: #{tpu_custom_call.1} parent=31 // pred_check
          %p2763 = pneg %p107
        $region46: #{tpu_custom_call.1} parent=31 // pred_check_branch
          %2765 = sbr.rel (%p2763) target = $region48
        $region47: #{tpu_custom_call.1} parent=31 // pred_region
          %s2766 = smul.u32 32, %s21
          %2768 = vsyncadd %s2759, 0
          %s2769 = smul.addr %s2766, 8
          %s2770 = scalar_lea.hbm %s3, %s2769
          %s2771 = sshll.u32 %s2762, 4
          %s2772 = int_to_ptr.vmem [resolvable:$true] %s2771
          %s2773 = sshll.u32 %s2770, 4
          %s2774 = int_to_ptr.hbm [resolvable:$true] %s2773
          %2779 = dma.vmem_to_hbm [thread:$0]  %s2772, 4096, %s2774, %s2759, 128, 128, 8
        $region48: #{tpu_custom_call.1} parent=31 // pred_fallthru
          _
      $region32: #{tpu_custom_call.1} parent=5 // pred_fallthru
        _
      %p2780 = scmp.le.s32.totalorder 2, %s16
      // Predicated region
      $region49: #{tpu_custom_call.1} parent=5 // pred_check
        %p2781 = pneg %p2780
      $region50: #{tpu_custom_call.1} parent=5 // pred_check_branch
        %2783 = sbr.rel (%p2781) target = $region52
      $region51: #{tpu_custom_call.1} parent=5 // pred_region
        %s2784 = ssub.s32 %s16, 2
        // Predicated region
        $region53: #{tpu_custom_call.1} parent=51 // pred_check
          %p2785 = pneg %p113
        $region54: #{tpu_custom_call.1} parent=51 // pred_check_branch
          %2787 = sbr.rel (%p2785) target = $region56
        $region55: #{tpu_custom_call.1} parent=51 // pred_region
          %s2788 = sand.u32 %s98, 1
          %s2789 = scalar_lea.sflag [#allocation4], %s2788
          %s2790 = sand.u32 %s98, 1
          %s2791 = smul.addr %s2790, 256
          %s2792 = scalar_lea.vmem [#allocation8], %s2791
          %2794 = dma.done %s2789, 4096
        $region56: #{tpu_custom_call.1} parent=51 // pred_fallthru
          _
      $region52: #{tpu_custom_call.1} parent=5 // pred_fallthru
        _
    $region6: #{tpu_custom_call.1} parent=1 // loop_footer
      %s20 = sadd.s32 1, %s16
    $region7: #{tpu_custom_call.1} parent=1 // loop_footer_branch
      %15 = sbr.rel target = $region3
    $region8: #{tpu_custom_call.1} parent=1 // loop_exit
      _
    %2795 = vsyncpa [#allocation3], 1
    %s2796 = scalar_lea.sflag [#allocation3], 1
    %2797 = vsyncpa %s2796, 1
    %2798 = vsyncpa [#allocation6], 1
    %2799 = vsyncpa [#allocation4], 1
    %s2800 = scalar_lea.sflag [#allocation4], 1
    %2801 = vsyncpa %s2800, 1

</llo_original>
